<compile_context>
chip_gen: v6e
topology: v6e:2x2x1
jax: 0.10.0
libtpu: 0.0.40
codegen_flags: <defaults>
</compile_context>

<pallas_src>
import functools

import jax
import jax.numpy as jnp
from jax import lax
from jax.experimental import pallas as pl
from jax.experimental.pallas import tpu as pltpu


# --------------------------------------------------------------------------
# Kernels
# --------------------------------------------------------------------------
def _conv_ps_kernel_taps(x_ref, w_ref, b_ref, o_ref, *, K, TH, Wo, Cin):
    """Per-tap MXU accumulation (no im2col scratch).

    Best when K*K*Cin is small: there are zero masked patch stores; the
    K*K shifted-slab contractions ride the otherwise idle MXU slot and the
    f32 accumulation is a handful of VPU adds.

    x_ref: (Hp, Wp, Cin)    bf16  padded NHWC image, resident across blocks
    w_ref: (Cout, K*K*Cin)  bf16  weights, tap-major / cin-minor
    b_ref: (Cout, 1)        f32   bias
    o_ref: (Cout, TH*Wo)    bf16  conv output block, transposed (lane-dense)
    """
    Cout = w_ref.shape[0]
    h = pl.program_id(1)
    row0 = pl.multiple_of(h * TH, TH)   # alignment hint for the dynamic slice

    acc = jnp.zeros((Cout, TH * Wo), jnp.float32)
    for kh in range(K):                 # static, unrolled at trace time
        for kw in range(K):
            kk = kh * K + kw
            # Shifted slab for this tap: (TH, Wo, Cin).  The reshape only
            # merges the two major dims (the lane dim Cin is untouched), so
            # it is a layout relabel when Wo is sublane-tile aligned.
            slab = x_ref[pl.ds(row0 + kh, TH), kw:kw + Wo, :]
            slab = slab.reshape(TH * Wo, Cin)
            # (Cout, Cin) x (TH*Wo, Cin)^T -> (Cout, TH*Wo), f32 accumulation.
            acc = acc + lax.dot_general(
                w_ref[:, kk * Cin:(kk + 1) * Cin], slab,
                dimension_numbers=(((1,), (1,)), ((), ())),
                preferred_element_type=jnp.float32)
    o_ref[...] = (acc + b_ref[...]).astype(o_ref.dtype)


def _conv_ps_kernel_fused(x_ref, w_ref, b_ref, o_ref, p_ref, *, K, TH, Wo, Cin):
    """Single fused K*K*Cin contraction (im2col scratch in VMEM).

    Preferred when the reduction is deep (large Cin): one long MXU pass beats
    K*K shallow ones.  The im2col scratch is filled with K*K tall slab copies
    (one per tap) instead of the previous 72 row-sized masked stores.

    p_ref: (TH*Wo, K*K*Cin) bf16  VMEM scratch: im2col patches for this block
    """
    h = pl.program_id(1)
    row0 = pl.multiple_of(h * TH, TH)

    for kh in range(K):
        for kw in range(K):
            kk = kh * K + kw
            slab = x_ref[pl.ds(row0 + kh, TH), kw:kw + Wo, :]   # (TH, Wo, Cin)
            p_ref[:, kk * Cin:(kk + 1) * Cin] = slab.reshape(TH * Wo, Cin)

    # (Cout, KKC) x (TH*Wo, KKC)^T -> (Cout, TH*Wo), f32 accumulation.
    acc = lax.dot_general(
        w_ref[...], p_ref[...],
        dimension_numbers=(((1,), (1,)), ((), ())),
        preferred_element_type=jnp.float32)
    o_ref[...] = (acc + b_ref[...]).astype(o_ref.dtype)


# --------------------------------------------------------------------------
# Tiling / VMEM helpers
# --------------------------------------------------------------------------
def _choose_row_block(Ho, Wo, N, Cout, Cin, K, fused):
    """Pick TH (output rows per grid step).

    Goals: TH divides Ho; TH*Wo is a multiple of 128 (lane-dense output
    stores) unless the block is the whole image; per-step pipelined state
    stays well under VMEM; as few grid steps as possible (per-step overhead
    ~0.35us); at batch==1 still provide >=2 grid units so v7x's second
    TensorCore is not idle.
    """
    def lane_ok(th):
        thw = th * Wo
        return thw == Ho * Wo or thw % 128 == 0

    def step_bytes(th):
        thw = th * Wo
        b = 2 * thw * Cout * 2 + 4 * thw * Cout       # out block (x2) + f32 acc
        if fused:
            b += thw * K * K * Cin * 2                # im2col scratch
        return b

    budget = 8 << 20
    cands = [t for t in range(Ho, 0, -1)
             if Ho % t == 0 and lane_ok(t) and step_bytes(t) <= budget]
    if not cands:
        cands = [Ho]
    th = cands[0]                                      # fewest grid steps
    if N == 1 and th == Ho:                            # keep 2nd TC busy (v7x)
        smaller = [t for t in cands if t < Ho]
        if smaller:
            th = smaller[0]
    return th


def _vmem_capacity_bytes(default=64 << 20):
    """Generation-aware VMEM capacity (v5e/v6e: 128 MiB, v7x: 64 MiB)."""
    try:
        info = pltpu.get_tpu_info()
        return int(getattr(info, "vmem_capacity_bytes", default))
    except Exception:  # pragma: no cover - conservative fallback
        return default


# --------------------------------------------------------------------------
# Wrapper
# --------------------------------------------------------------------------
def pixel_shuffle_pack(x_nchw, w_hwio, bias, scale_factor, *,
                       fused_contraction=None):
    """Forward pass of PixelShufflePack.  Input NCHW, output NCHW (f32)."""
    N, Cin, H, W = x_nchw.shape
    K = w_hwio.shape[0]
    Cout = w_hwio.shape[-1]
    r = scale_factor
    out_ch = Cout // (r * r)
    assert K % 2 == 1, "padding=(K-1)//2 only matches the module for odd K"
    pad = (K - 1) // 2
    Ho, Wo = H, W
    Hp, Wp = H + 2 * pad, W + 2 * pad

    if fused_contraction is None:
        # Tiny reductions: per-tap MXU accumulation (no patch scratch).
        # Deep reductions: one fused K*K*Cin contraction.
        fused_contraction = (K * K * Cin) >= 128

    # Layout + zero-pad + bf16 cast: a single input-sized XLA pass.
    x_pad = jnp.pad(
        jnp.transpose(x_nchw, (0, 2, 3, 1)).astype(jnp.bfloat16),
        ((0, 0), (pad, pad), (pad, pad), (0, 0)))

    # Weights -> (Cout, K*K*Cin), tap-major / cin-minor.  Bias -> (Cout, 1).
    w2t = jnp.transpose(w_hwio.reshape(K * K, Cin, Cout), (2, 0, 1))
    w2t = w2t.reshape(Cout, K * K * Cin).astype(jnp.bfloat16)
    b2 = bias.reshape(Cout, 1).astype(jnp.float32)

    TH = _choose_row_block(Ho, Wo, N, Cout, Cin, K, fused_contraction)
    HB = Ho // TH
    THW = TH * Wo                          # 256 (full image) for the demo

    # Generation-aware VMEM budget: actual footprint, clamped by capacity.
    est = (2 * Hp * Wp * Cin * 2           # double-buffered resident image
           + 2 * Cout * K * K * Cin * 2    # weights
           + 2 * Cout * 4                  # bias
           + 2 * Cout * THW * 2            # double-buffered bf16 output block
           + (THW * K * K * Cin * 2 if fused_contraction else 0)
           + (2 << 20))                    # accumulators / headroom
    vmem_limit = int(min(max(32 << 20, est), 0.9 * _vmem_capacity_bytes()))

    if fused_contraction:
        kernel = functools.partial(_conv_ps_kernel_fused,
                                   K=K, TH=TH, Wo=Wo, Cin=Cin)
        scratch = (pltpu.VMEM((THW, K * K * Cin), jnp.bfloat16),)
    else:
        kernel = functools.partial(_conv_ps_kernel_taps,
                                   K=K, TH=TH, Wo=Wo, Cin=Cin)
        scratch = ()

    conv_t = pl.pallas_call(
        kernel,
        # bf16 output: halves HBM writeback and the epilogue transpose traffic.
        out_shape=jax.ShapeDtypeStruct((N, Cout, Ho * Wo), jnp.bfloat16),
        grid=(N, HB),
        in_specs=[
            # Whole padded image per batch element; the index_map ignores the
            # row-block index, so it is DMA'd once per n and stays resident.
            # TODO(synk): for production-size images (e.g. Cin=64, 512x512)
            # switch to halo-tiled (TH + 2*pad)-row input blocks so the
            # double-buffered image fits v7x's 64 MiB VMEM.
            pl.BlockSpec((None, Hp, Wp, Cin), lambda n, h: (n, 0, 0, 0)),
            pl.BlockSpec((Cout, K * K * Cin), lambda n, h: (0, 0)),
            pl.BlockSpec((Cout, 1), lambda n, h: (0, 0)),
        ],
        out_specs=pl.BlockSpec((None, Cout, THW), lambda n, h: (n, 0, h)),
        scratch_shapes=scratch,
        compiler_params=pltpu.CompilerParams(
            dimension_semantics=("parallel", "parallel"),
            vmem_limit_bytes=vmem_limit,
        ),
    )(x_pad, w2t, b2)

    # Pixel shuffle: out[n, c, h*r + i, w*r + j] = conv[n, c*r*r + i*r + j, h, w].
    # TODO(synk): the subpixel interleave stays in XLA (one bf16-read pass
    # fused with the final f32 cast); fusing the W-interleave into the kernel
    # store needs strided output placement Mosaic does not lower cleanly.
    y = conv_t.reshape(N, out_ch, r, r, Ho, Wo)
    y = jnp.transpose(y, (0, 1, 4, 2, 5, 3))
    return y.reshape(N, out_ch, Ho * r, Wo * r).astype(jnp.float32)


# --------------------------------------------------------------------------
# Demo / validation
# --------------------------------------------------------------------------
if __name__ == "__main__":
    key = jax.random.PRNGKey(0)
    kx, kw_, kb = jax.random.split(key, 3)

    # Module config: in_channels=4, out_channels=4, scale_factor=2, kernel=3
    N, Cin, H, W = 2, 4, 16, 16
    out_channels, r, K = 4, 2, 3
    Cout = out_channels * r * r            # conv expands channels by r^2

    x = jax.random.normal(kx, (N, Cin, H, W), dtype=jnp.float32)
    w = 0.1 * jax.random.normal(kw_, (K, K, Cin, Cout), dtype=jnp.float32)
    b = 0.1 * jax.random.normal(kb, (Cout,), dtype=jnp.float32)

    # Reference: f32 XLA conv + pixel shuffle.
    ref_conv = lax.conv_general_dilated(
        x,
        jnp.transpose(w, (3, 2, 0, 1)),                 # HWIO -> OIHW
        window_strides=(1, 1),
        padding=[((K - 1) // 2, (K - 1) // 2)] * 2,
        dimension_numbers=("NCHW", "OIHW", "NCHW"),
    ) + b.reshape(1, Cout, 1, 1)
    ref = ref_conv.reshape(N, out_channels, r, r, H, W)
    ref = jnp.transpose(ref, (0, 1, 4, 2, 5, 3)).reshape(
        N, out_channels, H * r, W * r)

    # Validate both kernel variants (per-tap accumulation is the default pick
    # for this tiny-Cin config; the fused im2col contraction is the large-Cin
    # path).  bf16 operands / output vs f32 reference -> loosened tolerance.
    for fused in (False, True):
        y = jax.block_until_ready(
            pixel_shuffle_pack(x, w, b, r, fused_contraction=fused))
        assert y.shape == (N, out_channels, H * r, W * r), y.shape
        assert jnp.allclose(y, ref, atol=5e-2, rtol=5e-2), (
            fused, float(jnp.max(jnp.abs(y - ref))))

    print("KERNEL_OK")
</pallas_src>

<mosaic_0001>
module attributes {stable_mosaic.version = 11 : i64} {
  func.func @_conv_ps_kernel_taps(%arg0: i32, %arg1: i32, %arg2: memref<1x18x18x4xbf16, #tpu.memory_space<vmem>>, %arg3: memref<16x36xbf16, #tpu.memory_space<vmem>>, %arg4: memref<16x1xf32, #tpu.memory_space<vmem>>, %arg5: memref<1x16x256xbf16, #tpu.memory_space<vmem>>) attributes {dimension_semantics = [#tpu.dimension_semantics<parallel>, #tpu.dimension_semantics<parallel>], iteration_bounds = array<i64: 2, 1>, scalar_prefetch = 0 : i64, scratch_operands = 0 : i64, tpu.core_type = #tpu.core_type<tc>, window_params = [{transform_indices = @transform_0, window_bounds = array<i64: 1, 18, 18, 4>}, {pipeline_mode = #tpu.pipeline_mode<synchronous>, transform_indices = @transform_1, window_bounds = array<i64: 16, 36>}, {pipeline_mode = #tpu.pipeline_mode<synchronous>, transform_indices = @transform_2, window_bounds = array<i64: 16, 1>}, {transform_indices = @transform_3, window_bounds = array<i64: 1, 16, 256>}]} {
    %c16_i32 = arith.constant 16 : i32
    %0 = arith.muli %arg1, %c16_i32 : i32
    %1 = tpu.assume_multiple %0, 16 : i32
    %cst = arith.constant 0.000000e+00 : f32
    %2 = vector.broadcast %cst : f32 to vector<16x256xf32>
    %c0_i32 = arith.constant 0 : i32
    %3 = arith.addi %1, %c0_i32 : i32
    %c0 = arith.constant 0 : index
    %4 = arith.index_cast %3 : i32 to index
    %c0_0 = arith.constant 0 : index
    %c0_1 = arith.constant 0 : index
    %5 = vector.load %arg2[%c0, %4, %c0_0, %c0_1] : memref<1x18x18x4xbf16, #tpu.memory_space<vmem>>, vector<1x16x16x4xbf16>
    %6 = vector.shape_cast %5 : vector<1x16x16x4xbf16> to vector<16x16x4xbf16>
    %7 = vector.shape_cast %6 : vector<16x16x4xbf16> to vector<256x4xbf16>
    %c0_2 = arith.constant 0 : index
    %c0_3 = arith.constant 0 : index
    %8 = vector.load %arg3[%c0_2, %c0_3] : memref<16x36xbf16, #tpu.memory_space<vmem>>, vector<16x4xbf16>
    %cst_4 = arith.constant dense<0.000000e+00> : vector<16x256xf32>
    %9 = tpu.matmul %8, %7, %cst_4 {dimension_numbers = #tpu.dot_dimension_numbers<[1], [1], [0], [0], [0, 0, 1, 0], [], []>} : vector<16x4xbf16>, vector<256x4xbf16>, vector<16x256xf32> -> vector<16x256xf32>
    %10 = arith.addf %2, %9 : vector<16x256xf32>
    %c0_i32_5 = arith.constant 0 : i32
    %11 = arith.addi %1, %c0_i32_5 : i32
    %c0_6 = arith.constant 0 : index
    %12 = arith.index_cast %11 : i32 to index
    %c1 = arith.constant 1 : index
    %c0_7 = arith.constant 0 : index
    %13 = vector.load %arg2[%c0_6, %12, %c1, %c0_7] : memref<1x18x18x4xbf16, #tpu.memory_space<vmem>>, vector<1x16x16x4xbf16>
    %14 = vector.shape_cast %13 : vector<1x16x16x4xbf16> to vector<16x16x4xbf16>
    %15 = vector.shape_cast %14 : vector<16x16x4xbf16> to vector<256x4xbf16>
    %c0_8 = arith.constant 0 : index
    %c4 = arith.constant 4 : index
    %16 = vector.load %arg3[%c0_8, %c4] : memref<16x36xbf16, #tpu.memory_space<vmem>>, vector<16x4xbf16>
    %cst_9 = arith.constant dense<0.000000e+00> : vector<16x256xf32>
    %17 = tpu.matmul %16, %15, %cst_9 {dimension_numbers = #tpu.dot_dimension_numbers<[1], [1], [0], [0], [0, 0, 1, 0], [], []>} : vector<16x4xbf16>, vector<256x4xbf16>, vector<16x256xf32> -> vector<16x256xf32>
    %18 = arith.addf %10, %17 : vector<16x256xf32>
    %c0_i32_10 = arith.constant 0 : i32
    %19 = arith.addi %1, %c0_i32_10 : i32
    %c0_11 = arith.constant 0 : index
    %20 = arith.index_cast %19 : i32 to index
    %c2 = arith.constant 2 : index
    %c0_12 = arith.constant 0 : index
    %21 = vector.load %arg2[%c0_11, %20, %c2, %c0_12] : memref<1x18x18x4xbf16, #tpu.memory_space<vmem>>, vector<1x16x16x4xbf16>
    %22 = vector.shape_cast %21 : vector<1x16x16x4xbf16> to vector<16x16x4xbf16>
    %23 = vector.shape_cast %22 : vector<16x16x4xbf16> to vector<256x4xbf16>
    %c0_13 = arith.constant 0 : index
    %c8 = arith.constant 8 : index
    %24 = vector.load %arg3[%c0_13, %c8] : memref<16x36xbf16, #tpu.memory_space<vmem>>, vector<16x4xbf16>
    %cst_14 = arith.constant dense<0.000000e+00> : vector<16x256xf32>
    %25 = tpu.matmul %24, %23, %cst_14 {dimension_numbers = #tpu.dot_dimension_numbers<[1], [1], [0], [0], [0, 0, 1, 0], [], []>} : vector<16x4xbf16>, vector<256x4xbf16>, vector<16x256xf32> -> vector<16x256xf32>
    %26 = arith.addf %18, %25 : vector<16x256xf32>
    %c1_i32 = arith.constant 1 : i32
    %27 = arith.addi %1, %c1_i32 : i32
    %c0_15 = arith.constant 0 : index
    %28 = arith.index_cast %27 : i32 to index
    %c0_16 = arith.constant 0 : index
    %c0_17 = arith.constant 0 : index
    %29 = vector.load %arg2[%c0_15, %28, %c0_16, %c0_17] : memref<1x18x18x4xbf16, #tpu.memory_space<vmem>>, vector<1x16x16x4xbf16>
    %30 = vector.shape_cast %29 : vector<1x16x16x4xbf16> to vector<16x16x4xbf16>
    %31 = vector.shape_cast %30 : vector<16x16x4xbf16> to vector<256x4xbf16>
    %c0_18 = arith.constant 0 : index
    %c12 = arith.constant 12 : index
    %32 = vector.load %arg3[%c0_18, %c12] : memref<16x36xbf16, #tpu.memory_space<vmem>>, vector<16x4xbf16>
    %cst_19 = arith.constant dense<0.000000e+00> : vector<16x256xf32>
    %33 = tpu.matmul %32, %31, %cst_19 {dimension_numbers = #tpu.dot_dimension_numbers<[1], [1], [0], [0], [0, 0, 1, 0], [], []>} : vector<16x4xbf16>, vector<256x4xbf16>, vector<16x256xf32> -> vector<16x256xf32>
    %34 = arith.addf %26, %33 : vector<16x256xf32>
    %c1_i32_20 = arith.constant 1 : i32
    %35 = arith.addi %1, %c1_i32_20 : i32
    %c0_21 = arith.constant 0 : index
    %36 = arith.index_cast %35 : i32 to index
    %c1_22 = arith.constant 1 : index
    %c0_23 = arith.constant 0 : index
    %37 = vector.load %arg2[%c0_21, %36, %c1_22, %c0_23] : memref<1x18x18x4xbf16, #tpu.memory_space<vmem>>, vector<1x16x16x4xbf16>
    %38 = vector.shape_cast %37 : vector<1x16x16x4xbf16> to vector<16x16x4xbf16>
    %39 = vector.shape_cast %38 : vector<16x16x4xbf16> to vector<256x4xbf16>
    %c0_24 = arith.constant 0 : index
    %c16 = arith.constant 16 : index
    %40 = vector.load %arg3[%c0_24, %c16] : memref<16x36xbf16, #tpu.memory_space<vmem>>, vector<16x4xbf16>
    %cst_25 = arith.constant dense<0.000000e+00> : vector<16x256xf32>
    %41 = tpu.matmul %40, %39, %cst_25 {dimension_numbers = #tpu.dot_dimension_numbers<[1], [1], [0], [0], [0, 0, 1, 0], [], []>} : vector<16x4xbf16>, vector<256x4xbf16>, vector<16x256xf32> -> vector<16x256xf32>
    %42 = arith.addf %34, %41 : vector<16x256xf32>
    %c1_i32_26 = arith.constant 1 : i32
    %43 = arith.addi %1, %c1_i32_26 : i32
    %c0_27 = arith.constant 0 : index
    %44 = arith.index_cast %43 : i32 to index
    %c2_28 = arith.constant 2 : index
    %c0_29 = arith.constant 0 : index
    %45 = vector.load %arg2[%c0_27, %44, %c2_28, %c0_29] : memref<1x18x18x4xbf16, #tpu.memory_space<vmem>>, vector<1x16x16x4xbf16>
    %46 = vector.shape_cast %45 : vector<1x16x16x4xbf16> to vector<16x16x4xbf16>
    %47 = vector.shape_cast %46 : vector<16x16x4xbf16> to vector<256x4xbf16>
    %c0_30 = arith.constant 0 : index
    %c20 = arith.constant 20 : index
    %48 = vector.load %arg3[%c0_30, %c20] : memref<16x36xbf16, #tpu.memory_space<vmem>>, vector<16x4xbf16>
    %cst_31 = arith.constant dense<0.000000e+00> : vector<16x256xf32>
    %49 = tpu.matmul %48, %47, %cst_31 {dimension_numbers = #tpu.dot_dimension_numbers<[1], [1], [0], [0], [0, 0, 1, 0], [], []>} : vector<16x4xbf16>, vector<256x4xbf16>, vector<16x256xf32> -> vector<16x256xf32>
    %50 = arith.addf %42, %49 : vector<16x256xf32>
    %c2_i32 = arith.constant 2 : i32
    %51 = arith.addi %1, %c2_i32 : i32
    %c0_32 = arith.constant 0 : index
    %52 = arith.index_cast %51 : i32 to index
    %c0_33 = arith.constant 0 : index
    %c0_34 = arith.constant 0 : index
    %53 = vector.load %arg2[%c0_32, %52, %c0_33, %c0_34] : memref<1x18x18x4xbf16, #tpu.memory_space<vmem>>, vector<1x16x16x4xbf16>
    %54 = vector.shape_cast %53 : vector<1x16x16x4xbf16> to vector<16x16x4xbf16>
    %55 = vector.shape_cast %54 : vector<16x16x4xbf16> to vector<256x4xbf16>
    %c0_35 = arith.constant 0 : index
    %c24 = arith.constant 24 : index
    %56 = vector.load %arg3[%c0_35, %c24] : memref<16x36xbf16, #tpu.memory_space<vmem>>, vector<16x4xbf16>
    %cst_36 = arith.constant dense<0.000000e+00> : vector<16x256xf32>
    %57 = tpu.matmul %56, %55, %cst_36 {dimension_numbers = #tpu.dot_dimension_numbers<[1], [1], [0], [0], [0, 0, 1, 0], [], []>} : vector<16x4xbf16>, vector<256x4xbf16>, vector<16x256xf32> -> vector<16x256xf32>
    %58 = arith.addf %50, %57 : vector<16x256xf32>
    %c2_i32_37 = arith.constant 2 : i32
    %59 = arith.addi %1, %c2_i32_37 : i32
    %c0_38 = arith.constant 0 : index
    %60 = arith.index_cast %59 : i32 to index
    %c1_39 = arith.constant 1 : index
    %c0_40 = arith.constant 0 : index
    %61 = vector.load %arg2[%c0_38, %60, %c1_39, %c0_40] : memref<1x18x18x4xbf16, #tpu.memory_space<vmem>>, vector<1x16x16x4xbf16>
    %62 = vector.shape_cast %61 : vector<1x16x16x4xbf16> to vector<16x16x4xbf16>
    %63 = vector.shape_cast %62 : vector<16x16x4xbf16> to vector<256x4xbf16>
    %c0_41 = arith.constant 0 : index
    %c28 = arith.constant 28 : index
    %64 = vector.load %arg3[%c0_41, %c28] : memref<16x36xbf16, #tpu.memory_space<vmem>>, vector<16x4xbf16>
    %cst_42 = arith.constant dense<0.000000e+00> : vector<16x256xf32>
    %65 = tpu.matmul %64, %63, %cst_42 {dimension_numbers = #tpu.dot_dimension_numbers<[1], [1], [0], [0], [0, 0, 1, 0], [], []>} : vector<16x4xbf16>, vector<256x4xbf16>, vector<16x256xf32> -> vector<16x256xf32>
    %66 = arith.addf %58, %65 : vector<16x256xf32>
    %c2_i32_43 = arith.constant 2 : i32
    %67 = arith.addi %1, %c2_i32_43 : i32
    %c0_44 = arith.constant 0 : index
    %68 = arith.index_cast %67 : i32 to index
    %c2_45 = arith.constant 2 : index
    %c0_46 = arith.constant 0 : index
    %69 = vector.load %arg2[%c0_44, %68, %c2_45, %c0_46] : memref<1x18x18x4xbf16, #tpu.memory_space<vmem>>, vector<1x16x16x4xbf16>
    %70 = vector.shape_cast %69 : vector<1x16x16x4xbf16> to vector<16x16x4xbf16>
    %71 = vector.shape_cast %70 : vector<16x16x4xbf16> to vector<256x4xbf16>
    %c0_47 = arith.constant 0 : index
    %c32 = arith.constant 32 : index
    %72 = vector.load %arg3[%c0_47, %c32] : memref<16x36xbf16, #tpu.memory_space<vmem>>, vector<16x4xbf16>
    %cst_48 = arith.constant dense<0.000000e+00> : vector<16x256xf32>
    %73 = tpu.matmul %72, %71, %cst_48 {dimension_numbers = #tpu.dot_dimension_numbers<[1], [1], [0], [0], [0, 0, 1, 0], [], []>} : vector<16x4xbf16>, vector<256x4xbf16>, vector<16x256xf32> -> vector<16x256xf32>
    %74 = arith.addf %66, %73 : vector<16x256xf32>
    %c0_49 = arith.constant 0 : index
    %c0_50 = arith.constant 0 : index
    %75 = vector.load %arg4[%c0_49, %c0_50] : memref<16x1xf32, #tpu.memory_space<vmem>>, vector<16x1xf32>
    %76 = vector.broadcast %75 : vector<16x1xf32> to vector<16x256xf32>
    %77 = arith.addf %74, %76 : vector<16x256xf32>
    %78 = arith.truncf %77 : vector<16x256xf32> to vector<16x256xbf16>
    %c0_51 = arith.constant 0 : index
    %c0_52 = arith.constant 0 : index
    %c0_53 = arith.constant 0 : index
    %79 = vector.load %arg5[%c0_51, %c0_52, %c0_53] : memref<1x16x256xbf16, #tpu.memory_space<vmem>>, vector<1x16x256xbf16>
    %80 = vector.shape_cast %79 : vector<1x16x256xbf16> to vector<16x256xbf16>
    %81 = vector.shape_cast %78 : vector<16x256xbf16> to vector<1x16x256xbf16>
    tpu.vector_store %arg5[%c0_51, %c0_52, %c0_53], %81 {strides = array<i32>} : memref<1x16x256xbf16, #tpu.memory_space<vmem>>, vector<1x16x256xbf16>,
    return
  }
  func.func @transform_0(%arg0: i32, %arg1: i32) -> (i32, i32, i32, i32) {
    %c0_i32 = arith.constant 0 : i32
    %c0_i32_0 = arith.constant 0 : i32
    %c0_i32_1 = arith.constant 0 : i32
    %c0_i32_2 = arith.constant 0 : i32
    return %arg0, %c0_i32, %c0_i32_0, %c0_i32_1 : i32, i32, i32, i32
  }
  func.func @transform_1(%arg0: i32, %arg1: i32) -> (i32, i32) {
    %c0_i32 = arith.constant 0 : i32
    %c0_i32_0 = arith.constant 0 : i32
    %c0_i32_1 = arith.constant 0 : i32
    return %c0_i32, %c0_i32_0 : i32, i32
  }
  func.func @transform_2(%arg0: i32, %arg1: i32) -> (i32, i32) {
    %c0_i32 = arith.constant 0 : i32
    %c0_i32_0 = arith.constant 0 : i32
    %c0_i32_1 = arith.constant 0 : i32
    return %c0_i32, %c0_i32_0 : i32, i32
  }
  func.func @transform_3(%arg0: i32, %arg1: i32) -> (i32, i32, i32) {
    %c0_i32 = arith.constant 0 : i32
    %c0_i32_0 = arith.constant 0 : i32
    return %arg0, %c0_i32, %arg1 : i32, i32, i32
  }
}

</mosaic_0001>

<llo_original>
// kernel: tpu_custom_call.1
$region0: #{tpu_custom_call.1}
  #allocation0 [shape = 'u32[]', space=smem, size = 0x4, offset = 0x4, fixed_abs, tag = 'smem constant byte address 0x4 - core index']
  #allocation1 [shape = 'u32[144,128]{1,0:T(1,128)}', space=vmem, size = 0x12000, scoped, tag = 'internal scratch']
  %s0 = inlined_call_operand.vmem [shape: bf16[2,18,18,4], index: 0, kind: input, shape index: {}]
  %s1 = inlined_call_operand.vmem [shape: bf16[16,36], index: 1, kind: input, shape index: {}]
  %s2 = inlined_call_operand.vmem [shape: f32[16,1], index: 2, kind: input, shape index: {}]
  %s3 = inlined_call_operand.hbm [shape: bf16[2,16,256], index: 3, kind: output, shape index: {}]
  %s4 = sld [smem:[#allocation0]]
  $region45: #{tpu_custom_call.1} parent=0
    _
  %s6 = ssub.s32 1, %s4
  %s7 = scalar_select 0, %s6, %s4
  $region1: #{tpu_custom_call.1} parent=0
    #allocation2 [shape = 'u8[16384]{0}', space=vmem, size = 0x4000, scoped, tag = 'output window, operand 0']
    #allocation3 [shape = 's32[2]{0}', space=sflag, size = 0x8, scoped, tag = 'scoped memory for tpu_custom_call.1']
    %8 = vsyncpa [#allocation3], 0
    %s9 = scalar_lea.sflag [#allocation3], 1
    %10 = vsyncpa %s9, 0
    loop: start=0, step=1, limit=4
    $region2: #{tpu_custom_call.1} parent=1 // loop_pre_header
      _
    $region3: #{tpu_custom_call.1} parent=1 // loop_header
      %s12 = sphi 0, %s16
      %p13 = scmp.ge.s32.totalorder %s12, 4
      %s19 = sphi 0, %s31
      %s20 = sphi 0, %s27
      %s21 = sphi 0, %s19
      %s22 = sphi 0, %s20
      %s23 = sphi 0, %s21
      %s24 = sphi 0, %s22
      %s34 = sphi 0, %s36
      %s37 = sphi 0, %s34
      %s38 = sphi 0, %s37
      %s54 = sphi 0, %s38
      %s58 = sphi 0, %s58
      %s60 = sphi 0, %s58
      %s61 = sphi 0, %s60
      %s75 = sphi 0, %s61
      %s79 = sphi 0, %s79
      %s81 = sphi 0, %s79
      %s82 = sphi 0, %s81
      %s96 = sphi 0, %s82
      %s104 = sphi 0, %s106
      %s107 = sphi 0, %s104
      %s108 = sphi 0, %s107
      %s124 = sphi 0, %s108
    $region4: #{tpu_custom_call.1} parent=1 // loop_header_branch
      %15 = sbr.rel (%p13) target = $region8
    $region5: #{tpu_custom_call.1} parent=1 // loop_body
      %s17 = ssub.s32 %s12, 1
      %s18 = ssub.s32 %s12, 2
      %s25 = sadd.s32 1, %s20
      %p26 = scmp.ge.s32.totalorder %s25, 1
      %s27 = scalar_select %p26, 0, %s25
      %s28 = sadd.s32 1, %s19
      %s29 = scalar_select %p26, %s28, %s19
      %p30 = scmp.ge.s32.totalorder %s29, 2
      %s31 = scalar_select %p30, 0, %s29
      %s32 = ssub.s32 %s19, %s31
      %p33 = scmp.eq.s32.totalorder %s32, 0
      %s35 = sadd.s32 %s34, 1
      %s36 = scalar_select %p33, %s34, %s35
      %p39 = pneg %p33
      %p40 = scmp.eq.s32.totalorder %s12, 1
      %p41 = por %p39, %p40
      %p42 = scmp.ne.s32.totalorder %s34, %s37
      %p43 = scmp.eq.s32.totalorder %s12, 0
      %p44 = por %p42, %p43
      %p45 = scmp.ne.s32.totalorder %s34, %s37
      %p46 = scmp.eq.s32.totalorder %s17, 1
      %p47 = por %p45, %p46
      %p48 = scmp.ne.s32.totalorder %s37, %s38
      %p49 = scmp.eq.s32.totalorder %s17, 0
      %p50 = por %p48, %p49
      %p51 = scmp.ne.s32.totalorder %s37, %s38
      %p52 = scmp.eq.s32.totalorder %s18, 1
      %p53 = por %p51, %p52
      %p55 = scmp.ne.s32.totalorder %s38, %s54
      %p56 = scmp.eq.s32.totalorder %s18, 0
      %p57 = por %p55, %p56
      %s59 = sadd.s32 %s58, 1
      %p62 = scmp.eq.s32.totalorder %s12, 1
      %p63 = scmp.ne.s32.totalorder %s58, %s60
      %p64 = scmp.eq.s32.totalorder %s12, 0
      %p65 = por %p63, %p64
      %p66 = scmp.ne.s32.totalorder %s58, %s60
      %p67 = scmp.eq.s32.totalorder %s17, 1
      %p68 = por %p66, %p67
      %p69 = scmp.ne.s32.totalorder %s60, %s61
      %p70 = scmp.eq.s32.totalorder %s17, 0
      %p71 = por %p69, %p70
      %p72 = scmp.ne.s32.totalorder %s60, %s61
      %p73 = scmp.eq.s32.totalorder %s18, 1
      %p74 = por %p72, %p73
      %p76 = scmp.ne.s32.totalorder %s61, %s75
      %p77 = scmp.eq.s32.totalorder %s18, 0
      %p78 = por %p76, %p77
      %s80 = sadd.s32 %s79, 1
      %p83 = scmp.eq.s32.totalorder %s12, 1
      %p84 = scmp.ne.s32.totalorder %s79, %s81
      %p85 = scmp.eq.s32.totalorder %s12, 0
      %p86 = por %p84, %p85
      %p87 = scmp.ne.s32.totalorder %s79, %s81
      %p88 = scmp.eq.s32.totalorder %s17, 1
      %p89 = por %p87, %p88
      %p90 = scmp.ne.s32.totalorder %s81, %s82
      %p91 = scmp.eq.s32.totalorder %s17, 0
      %p92 = por %p90, %p91
      %p93 = scmp.ne.s32.totalorder %s81, %s82
      %p94 = scmp.eq.s32.totalorder %s18, 1
      %p95 = por %p93, %p94
      %p97 = scmp.ne.s32.totalorder %s82, %s96
      %p98 = scmp.eq.s32.totalorder %s18, 0
      %p99 = por %p97, %p98
      %s100 = ssub.s32 %s19, %s31
      %s101 = ssub.s32 %s20, %s27
      %s102 = sor.u32 %s100, %s101
      %p103 = scmp.eq.s32.totalorder %s102, 0
      %s105 = sadd.s32 %s104, 1
      %s106 = scalar_select %p103, %s104, %s105
      %p109 = pneg %p103
      %p110 = scmp.eq.s32.totalorder %s12, 1
      %p111 = por %p109, %p110
      %p112 = scmp.ne.s32.totalorder %s104, %s107
      %p113 = scmp.eq.s32.totalorder %s12, 0
      %p114 = por %p112, %p113
      %p115 = scmp.ne.s32.totalorder %s104, %s107
      %p116 = scmp.eq.s32.totalorder %s17, 1
      %p117 = por %p115, %p116
      %p118 = scmp.ne.s32.totalorder %s107, %s108
      %p119 = scmp.eq.s32.totalorder %s17, 0
      %p120 = por %p118, %p119
      %p121 = scmp.ne.s32.totalorder %s107, %s108
      %p122 = scmp.eq.s32.totalorder %s18, 1
      %p123 = por %p121, %p122
      %p125 = scmp.ne.s32.totalorder %s108, %s124
      %p126 = scmp.eq.s32.totalorder %s18, 0
      %p127 = por %p125, %p126
      %p128 = scmp.le.s32.totalorder 1, %s12
      %p129 = scmp.lt.s32.totalorder %s12, 3
      %p130 = pnand %p128, %p129
      %p131 = pneg %p130
      // Predicated region
      $region9: #{tpu_custom_call.1} parent=5 // pred_check
        _
      $region10: #{tpu_custom_call.1} parent=5 // pred_check_branch
        %133 = sbr.rel (%p130) target = $region12
      $region11: #{tpu_custom_call.1} parent=5 // pred_region
        %s134 = ssub.s32 %s12, 1
        // Predicated region
        $region13: #{tpu_custom_call.1} parent=11 // pred_check
          %p135 = pneg %p71
        $region14: #{tpu_custom_call.1} parent=11 // pred_check_branch
          %137 = sbr.rel (%p135) target = $region16
        $region15: #{tpu_custom_call.1} parent=11 // pred_region
          _
        $region16: #{tpu_custom_call.1} parent=11 // pred_fallthru
          _
        // Predicated region
        $region17: #{tpu_custom_call.1} parent=11 // pred_check
          %p138 = pneg %p92
        $region18: #{tpu_custom_call.1} parent=11 // pred_check_branch
          %140 = sbr.rel (%p138) target = $region20
        $region19: #{tpu_custom_call.1} parent=11 // pred_region
          _
        $region20: #{tpu_custom_call.1} parent=11 // pred_fallthru
          _
      $region12: #{tpu_custom_call.1} parent=5 // pred_fallthru
        _
      %p141 = scmp.lt.s32.totalorder %s12, 2
      // Predicated region
      $region21: #{tpu_custom_call.1} parent=5 // pred_check
        %p142 = pneg %p141
      $region22: #{tpu_custom_call.1} parent=5 // pred_check_branch
        %144 = sbr.rel (%p142) target = $region24
      $region23: #{tpu_custom_call.1} parent=5 // pred_region
        // Predicated region
        $region25: #{tpu_custom_call.1} parent=23 // pred_check
          %p145 = pneg %p44
        $region26: #{tpu_custom_call.1} parent=23 // pred_check_branch
          %147 = sbr.rel (%p145) target = $region28
        $region27: #{tpu_custom_call.1} parent=23 // pred_region
          %p148 = scmp.lt.s32.totalorder %s19, 1
          %s149 = scalar_select %p148, %s19, 1
          %s150 = smul.addr %s149, 54
          %s151 = smul.addr %s150, 4
          %s152 = scalar_lea.vmem %s0, %s151
        $region28: #{tpu_custom_call.1} parent=23 // pred_fallthru
          _
      $region24: #{tpu_custom_call.1} parent=5 // pred_fallthru
        _
      %p153 = scmp.le.s32.totalorder 1, %s12
      %p154 = scmp.lt.s32.totalorder %s12, 3
      %p155 = pnand %p153, %p154
      %p156 = pneg %p155
      // Predicated region
      $region29: #{tpu_custom_call.1} parent=5 // pred_check
        _
      $region30: #{tpu_custom_call.1} parent=5 // pred_check_branch
        %158 = sbr.rel (%p155) target = $region32
      $region31: #{tpu_custom_call.1} parent=5 // pred_region
        %s159 = ssub.s32 %s12, 1
        %p160 = scmp.lt.s32.totalorder %s21, 1
        %s161 = scalar_select %p160, %s21, 1
        %s162 = smul.addr %s161, 54
        %s163 = smul.addr %s162, 4
        %s164 = scalar_lea.vmem %s0, %s163
        %p165 = pneg %p50
        %p166 = pneg %p47
        %p167 = pneg %p71
        %p168 = pneg %p68
        %p169 = pneg %p92
        %p170 = pneg %p89
        %p171 = pneg %p120
        %p172 = pneg %p117
        %s173 = sand.u32 %s107, 1
        %s174 = scalar_lea.sflag [#allocation3], %s173
        %s175 = sand.u32 %s107, 1
        %s176 = smul.addr %s175, 16
        %s177 = scalar_lea.vmem [#allocation2], %s176
        %p178 = scmp.lt.s32.totalorder %s21, 1
        %s179 = scalar_select %p178, %s21, 1
        %s180 = smul.addr %s179, 54
        %s181 = smul.addr %s180, 4
        %s182 = scalar_lea.vmem %s0, %s181
        %s183 = smul.u32 2, %s22
        %s185 = smul.u32 %s22, 16
        %s186 = smul.u32 %s185, 3
        %s187 = smul.addr %s186, 4
        %s188 = scalar_lea.vmem %s182, %s187
        %v189 = vld [vmem:[%s188] sm:$0xf]
        %v190 = vld [vmem:[%s188 + $0x4] sm:$0xf]
        %v191 = vld [vmem:[%s188 + $0xc] sm:$0xf]
        %v192 = vld [vmem:[%s188 + $0x10] sm:$0xf]
        %v193 = vld [vmem:[%s188 + $0x18] sm:$0xf]
        %v194 = vld [vmem:[%s188 + $0x1c] sm:$0xf]
        %v195 = vld [vmem:[%s188 + $0x24] sm:$0xf]
        %v196 = vld [vmem:[%s188 + $0x28] sm:$0xf]
        %v197 = vld [vmem:[%s188 + $0x30] sm:$0xf]
        %v198 = vld [vmem:[%s188 + $0x34] sm:$0xf]
        %v199 = vld [vmem:[%s188 + $0x3c] sm:$0xf]
        %v200 = vld [vmem:[%s188 + $0x40] sm:$0xf]
        %v201 = vld [vmem:[%s188 + $0x48] sm:$0xf]
        %v202 = vld [vmem:[%s188 + $0x4c] sm:$0xf]
        %v203 = vld [vmem:[%s188 + $0x54] sm:$0xf]
        %v204 = vld [vmem:[%s188 + $0x58] sm:$0xf]
        %v205 = vld [vmem:[%s188 + $0x60] sm:$0xf]
        %v206 = vld [vmem:[%s188 + $0x64] sm:$0xf]
        %v207 = vld [vmem:[%s188 + $0x6c] sm:$0xf]
        %v208 = vld [vmem:[%s188 + $0x70] sm:$0xf]
        %v209 = vld [vmem:[%s188 + $0x78] sm:$0xf]
        %v210 = vld [vmem:[%s188 + $0x7c] sm:$0xf]
        %v211 = vld [vmem:[%s188 + $0x84] sm:$0xf]
        %v212 = vld [vmem:[%s188 + $0x88] sm:$0xf]
        %v213 = vld [vmem:[%s188 + $0x90] sm:$0xf]
        %v214 = vld [vmem:[%s188 + $0x94] sm:$0xf]
        %v215 = vld [vmem:[%s188 + $0x9c] sm:$0xf]
        %v216 = vld [vmem:[%s188 + $0xa0] sm:$0xf]
        %v217 = vld [vmem:[%s188 + $0xa8] sm:$0xf]
        %v218 = vld [vmem:[%s188 + $0xac] sm:$0xf]
        %v219 = vld [vmem:[%s188 + $0xb4] sm:$0xf]
        %v220 = vld [vmem:[%s188 + $0xb8] sm:$0xf]
        %v221 = vld [vmem:[%s1] sm:$0xf]
        %v222 = vld [vmem:[%s1 + $0x4] sm:$0xf]
        %v223 = vld [vmem:[%s188 + $0x8] sm:$0x1]
        %v224 = vld [vmem:[%s188 + $0x14] sm:$0x1]
        %v225 = vld [vmem:[%s188 + $0x20] sm:$0x1]
        %v226 = vld [vmem:[%s188 + $0x2c] sm:$0x1]
        %v227 = vld [vmem:[%s188 + $0x38] sm:$0x1]
        %v228 = vld [vmem:[%s188 + $0x44] sm:$0x1]
        %v229 = vld [vmem:[%s188 + $0x50] sm:$0x1]
        %v230 = vld [vmem:[%s188 + $0x5c] sm:$0x1]
        %v231 = vld [vmem:[%s188 + $0x68] sm:$0x1]
        %v232 = vld [vmem:[%s188 + $0x74] sm:$0x1]
        %v233 = vld [vmem:[%s188 + $0x80] sm:$0x1]
        %v234 = vld [vmem:[%s188 + $0x8c] sm:$0x1]
        %v235 = vld [vmem:[%s188 + $0x98] sm:$0x1]
        %v236 = vld [vmem:[%s188 + $0xa4] sm:$0x1]
        %v237 = vld [vmem:[%s188 + $0xb0] sm:$0x1]
        %v238 = vld [vmem:[%s188 + $0xbc] sm:$0x1]
        %vm239 = vsmask.f32 3328
        %vm240 = vsmask.f32 7440
        %vm241 = vmor %vm239, %vm240
        %v243 = vshrl.u32 %v189, 16
        %v245 = vrot.slane %v243, 4
        %v246 = vshll.u32 %v189, 16
        %v248 = vrot.slane %v246, 5
        %v249 = vor.u32 %v245, %v248
        %v250 = vrot.slane %v249, 4
        %v252 = vshll.u32 %v190, 16
        %v254 = vrot.slane %v252, 5
        %v255 = vsel %vm241, %v250, %v254
        %v256 = vshrl.u32 %v190, 16
        %v258 = vrot.slane %v256, 4
        %v259 = vor.u32 %v258, %v254
        %v260 = vrot.slane %v259, 4
        %v262 = vshll.u32 %v223, 16
        %v264 = vrot.slane %v262, 5
        %v265 = vsel %vm241, %v260, %v264
        %v267 = vshrl.u32 %v191, 16
        %v269 = vrot.slane %v267, 4
        %v270 = vshll.u32 %v191, 16
        %v272 = vrot.slane %v270, 5
        %v273 = vor.u32 %v269, %v272
        %v274 = vrot.slane %v273, 4
        %v276 = vshll.u32 %v192, 16
        %v278 = vrot.slane %v276, 5
        %v279 = vsel %vm241, %v274, %v278
        %v280 = vshrl.u32 %v192, 16
        %v282 = vrot.slane %v280, 4
        %v283 = vor.u32 %v282, %v278
        %v284 = vrot.slane %v283, 4
        %v286 = vshll.u32 %v224, 16
        %v288 = vrot.slane %v286, 5
        %v289 = vsel %vm241, %v284, %v288
        %v291 = vshrl.u32 %v193, 16
        %v293 = vrot.slane %v291, 4
        %v294 = vshll.u32 %v193, 16
        %v296 = vrot.slane %v294, 5
        %v297 = vor.u32 %v293, %v296
        %v298 = vrot.slane %v297, 4
        %v300 = vshll.u32 %v194, 16
        %v302 = vrot.slane %v300, 5
        %v303 = vsel %vm241, %v298, %v302
        %v304 = vshrl.u32 %v194, 16
        %v306 = vrot.slane %v304, 4
        %v307 = vor.u32 %v306, %v302
        %v308 = vrot.slane %v307, 4
        %v310 = vshll.u32 %v225, 16
        %v312 = vrot.slane %v310, 5
        %v313 = vsel %vm241, %v308, %v312
        %v315 = vshrl.u32 %v195, 16
        %v317 = vrot.slane %v315, 4
        %v318 = vshll.u32 %v195, 16
        %v320 = vrot.slane %v318, 5
        %v321 = vor.u32 %v317, %v320
        %v322 = vrot.slane %v321, 4
        %v324 = vshll.u32 %v196, 16
        %v326 = vrot.slane %v324, 5
        %v327 = vsel %vm241, %v322, %v326
        %v328 = vshrl.u32 %v196, 16
        %v330 = vrot.slane %v328, 4
        %v331 = vor.u32 %v330, %v326
        %v332 = vrot.slane %v331, 4
        %v334 = vshll.u32 %v226, 16
        %v336 = vrot.slane %v334, 5
        %v337 = vsel %vm241, %v332, %v336
        %v339 = vshrl.u32 %v197, 16
        %v341 = vrot.slane %v339, 4
        %v342 = vshll.u32 %v197, 16
        %v344 = vrot.slane %v342, 5
        %v345 = vor.u32 %v341, %v344
        %v346 = vrot.slane %v345, 4
        %v348 = vshll.u32 %v198, 16
        %v350 = vrot.slane %v348, 5
        %v351 = vsel %vm241, %v346, %v350
        %v352 = vshrl.u32 %v198, 16
        %v354 = vrot.slane %v352, 4
        %v355 = vor.u32 %v354, %v350
        %v356 = vrot.slane %v355, 4
        %v358 = vshll.u32 %v227, 16
        %v360 = vrot.slane %v358, 5
        %v361 = vsel %vm241, %v356, %v360
        %v363 = vshrl.u32 %v199, 16
        %v365 = vrot.slane %v363, 4
        %v366 = vshll.u32 %v199, 16
        %v368 = vrot.slane %v366, 5
        %v369 = vor.u32 %v365, %v368
        %v370 = vrot.slane %v369, 4
        %v372 = vshll.u32 %v200, 16
        %v374 = vrot.slane %v372, 5
        %v375 = vsel %vm241, %v370, %v374
        %v376 = vshrl.u32 %v200, 16
        %v378 = vrot.slane %v376, 4
        %v379 = vor.u32 %v378, %v374
        %v380 = vrot.slane %v379, 4
        %v382 = vshll.u32 %v228, 16
        %v384 = vrot.slane %v382, 5
        %v385 = vsel %vm241, %v380, %v384
        %v387 = vshrl.u32 %v201, 16
        %v389 = vrot.slane %v387, 4
        %v390 = vshll.u32 %v201, 16
        %v392 = vrot.slane %v390, 5
        %v393 = vor.u32 %v389, %v392
        %v394 = vrot.slane %v393, 4
        %v396 = vshll.u32 %v202, 16
        %v398 = vrot.slane %v396, 5
        %v399 = vsel %vm241, %v394, %v398
        %v400 = vshrl.u32 %v202, 16
        %v402 = vrot.slane %v400, 4
        %v403 = vor.u32 %v402, %v398
        %v404 = vrot.slane %v403, 4
        %v406 = vshll.u32 %v229, 16
        %v408 = vrot.slane %v406, 5
        %v409 = vsel %vm241, %v404, %v408
        %v411 = vshrl.u32 %v203, 16
        %v413 = vrot.slane %v411, 4
        %v414 = vshll.u32 %v203, 16
        %v416 = vrot.slane %v414, 5
        %v417 = vor.u32 %v413, %v416
        %v418 = vrot.slane %v417, 4
        %v420 = vshll.u32 %v204, 16
        %v422 = vrot.slane %v420, 5
        %v423 = vsel %vm241, %v418, %v422
        %v424 = vshrl.u32 %v204, 16
        %v426 = vrot.slane %v424, 4
        %v427 = vor.u32 %v426, %v422
        %v428 = vrot.slane %v427, 4
        %v430 = vshll.u32 %v230, 16
        %v432 = vrot.slane %v430, 5
        %v433 = vsel %vm241, %v428, %v432
        %v435 = vshrl.u32 %v205, 16
        %v437 = vrot.slane %v435, 4
        %v438 = vshll.u32 %v205, 16
        %v440 = vrot.slane %v438, 5
        %v441 = vor.u32 %v437, %v440
        %v442 = vrot.slane %v441, 4
        %v444 = vshll.u32 %v206, 16
        %v446 = vrot.slane %v444, 5
        %v447 = vsel %vm241, %v442, %v446
        %v448 = vshrl.u32 %v206, 16
        %v450 = vrot.slane %v448, 4
        %v451 = vor.u32 %v450, %v446
        %v452 = vrot.slane %v451, 4
        %v454 = vshll.u32 %v231, 16
        %v456 = vrot.slane %v454, 5
        %v457 = vsel %vm241, %v452, %v456
        %v459 = vshrl.u32 %v207, 16
        %v461 = vrot.slane %v459, 4
        %v462 = vshll.u32 %v207, 16
        %v464 = vrot.slane %v462, 5
        %v465 = vor.u32 %v461, %v464
        %v466 = vrot.slane %v465, 4
        %v468 = vshll.u32 %v208, 16
        %v470 = vrot.slane %v468, 5
        %v471 = vsel %vm241, %v466, %v470
        %v472 = vshrl.u32 %v208, 16
        %v474 = vrot.slane %v472, 4
        %v475 = vor.u32 %v474, %v470
        %v476 = vrot.slane %v475, 4
        %v478 = vshll.u32 %v232, 16
        %v480 = vrot.slane %v478, 5
        %v481 = vsel %vm241, %v476, %v480
        %v483 = vshrl.u32 %v209, 16
        %v485 = vrot.slane %v483, 4
        %v486 = vshll.u32 %v209, 16
        %v488 = vrot.slane %v486, 5
        %v489 = vor.u32 %v485, %v488
        %v490 = vrot.slane %v489, 4
        %v492 = vshll.u32 %v210, 16
        %v494 = vrot.slane %v492, 5
        %v495 = vsel %vm241, %v490, %v494
        %v496 = vshrl.u32 %v210, 16
        %v498 = vrot.slane %v496, 4
        %v499 = vor.u32 %v498, %v494
        %v500 = vrot.slane %v499, 4
        %v502 = vshll.u32 %v233, 16
        %v504 = vrot.slane %v502, 5
        %v505 = vsel %vm241, %v500, %v504
        %v507 = vshrl.u32 %v211, 16
        %v509 = vrot.slane %v507, 4
        %v510 = vshll.u32 %v211, 16
        %v512 = vrot.slane %v510, 5
        %v513 = vor.u32 %v509, %v512
        %v514 = vrot.slane %v513, 4
        %v516 = vshll.u32 %v212, 16
        %v518 = vrot.slane %v516, 5
        %v519 = vsel %vm241, %v514, %v518
        %v520 = vshrl.u32 %v212, 16
        %v522 = vrot.slane %v520, 4
        %v523 = vor.u32 %v522, %v518
        %v524 = vrot.slane %v523, 4
        %v526 = vshll.u32 %v234, 16
        %v528 = vrot.slane %v526, 5
        %v529 = vsel %vm241, %v524, %v528
        %v531 = vshrl.u32 %v213, 16
        %v533 = vrot.slane %v531, 4
        %v534 = vshll.u32 %v213, 16
        %v536 = vrot.slane %v534, 5
        %v537 = vor.u32 %v533, %v536
        %v538 = vrot.slane %v537, 4
        %v540 = vshll.u32 %v214, 16
        %v542 = vrot.slane %v540, 5
        %v543 = vsel %vm241, %v538, %v542
        %v544 = vshrl.u32 %v214, 16
        %v546 = vrot.slane %v544, 4
        %v547 = vor.u32 %v546, %v542
        %v548 = vrot.slane %v547, 4
        %v550 = vshll.u32 %v235, 16
        %v552 = vrot.slane %v550, 5
        %v553 = vsel %vm241, %v548, %v552
        %v555 = vshrl.u32 %v215, 16
        %v557 = vrot.slane %v555, 4
        %v558 = vshll.u32 %v215, 16
        %v560 = vrot.slane %v558, 5
        %v561 = vor.u32 %v557, %v560
        %v562 = vrot.slane %v561, 4
        %v564 = vshll.u32 %v216, 16
        %v566 = vrot.slane %v564, 5
        %v567 = vsel %vm241, %v562, %v566
        %v568 = vshrl.u32 %v216, 16
        %v570 = vrot.slane %v568, 4
        %v571 = vor.u32 %v570, %v566
        %v572 = vrot.slane %v571, 4
        %v574 = vshll.u32 %v236, 16
        %v576 = vrot.slane %v574, 5
        %v577 = vsel %vm241, %v572, %v576
        %v579 = vshrl.u32 %v217, 16
        %v581 = vrot.slane %v579, 4
        %v582 = vshll.u32 %v217, 16
        %v584 = vrot.slane %v582, 5
        %v585 = vor.u32 %v581, %v584
        %v586 = vrot.slane %v585, 4
        %v588 = vshll.u32 %v218, 16
        %v590 = vrot.slane %v588, 5
        %v591 = vsel %vm241, %v586, %v590
        %v592 = vshrl.u32 %v218, 16
        %v594 = vrot.slane %v592, 4
        %v595 = vor.u32 %v594, %v590
        %v596 = vrot.slane %v595, 4
        %v598 = vshll.u32 %v237, 16
        %v600 = vrot.slane %v598, 5
        %v601 = vsel %vm241, %v596, %v600
        %v603 = vshrl.u32 %v219, 16
        %v605 = vrot.slane %v603, 4
        %v606 = vshll.u32 %v219, 16
        %v608 = vrot.slane %v606, 5
        %v609 = vor.u32 %v605, %v608
        %v610 = vrot.slane %v609, 4
        %v612 = vshll.u32 %v220, 16
        %v614 = vrot.slane %v612, 5
        %v615 = vsel %vm241, %v610, %v614
        %v616 = vshrl.u32 %v220, 16
        %v618 = vrot.slane %v616, 4
        %v619 = vor.u32 %v618, %v614
        %v620 = vrot.slane %v619, 4
        %v622 = vshll.u32 %v238, 16
        %v624 = vrot.slane %v622, 5
        %v625 = vsel %vm241, %v620, %v624
        %v628 = vunpack.c.l.b16 %v221
        %v629 = vunpack.c.l.b16 %v222
        %v630 = vpack.c.b16 %v629, %v628
        %631 = vrot.lane.b32.xlu0 %v630, 124
        %v632 = vpop.permute.xlu0 %631
        %v633 = vunpack.c.l.b16 %v255
        %v634 = vunpack.c.l.b16 %v265
        %v635 = vunpack.c.l.b16 %v279
        %v636 = vunpack.c.l.b16 %v289
        %v637 = vunpack.c.l.b16 %v303
        %v638 = vunpack.c.l.b16 %v313
        %v639 = vunpack.c.l.b16 %v327
        %v640 = vunpack.c.l.b16 %v337
        %v641 = vunpack.c.l.b16 %v351
        %v642 = vunpack.c.l.b16 %v361
        %v643 = vunpack.c.l.b16 %v375
        %v644 = vunpack.c.l.b16 %v385
        %v645 = vunpack.c.l.b16 %v399
        %v646 = vunpack.c.l.b16 %v409
        %v647 = vunpack.c.l.b16 %v423
        %v648 = vunpack.c.l.b16 %v433
        %v649 = vunpack.c.l.b16 %v447
        %v650 = vunpack.c.l.b16 %v457
        %v651 = vunpack.c.l.b16 %v471
        %v652 = vunpack.c.l.b16 %v481
        %v653 = vunpack.c.l.b16 %v495
        %v654 = vunpack.c.l.b16 %v505
        %v655 = vunpack.c.l.b16 %v519
        %v656 = vunpack.c.l.b16 %v529
        %v657 = vunpack.c.l.b16 %v543
        %v658 = vunpack.c.l.b16 %v553
        %v659 = vunpack.c.l.b16 %v567
        %v660 = vunpack.c.l.b16 %v577
        %v661 = vunpack.c.l.b16 %v591
        %v662 = vunpack.c.l.b16 %v601
        %v663 = vunpack.c.l.b16 %v615
        %v664 = vunpack.c.l.b16 %v625
        %v665 = vpack.c.b16 %v634, %v633
        %v666 = vpack.c.b16 %v636, %v635
        %v667 = vpack.c.b16 %v638, %v637
        %v668 = vpack.c.b16 %v640, %v639
        %v669 = vpack.c.b16 %v642, %v641
        %v670 = vpack.c.b16 %v644, %v643
        %v671 = vpack.c.b16 %v646, %v645
        %v672 = vpack.c.b16 %v648, %v647
        %v673 = vpack.c.b16 %v650, %v649
        %v674 = vpack.c.b16 %v652, %v651
        %v675 = vpack.c.b16 %v654, %v653
        %v676 = vpack.c.b16 %v656, %v655
        %v677 = vpack.c.b16 %v658, %v657
        %v678 = vpack.c.b16 %v660, %v659
        %v679 = vpack.c.b16 %v662, %v661
        %v680 = vpack.c.b16 %v664, %v663
        %vm681 = vcmask 31744
        %v683 = vsel %vm681, %v632, 0
        %v686 = vsel %vm681, %v665, 0
        %v689 = vsel %vm681, %v666, 0
        %v692 = vsel %vm681, %v667, 0
        %v695 = vsel %vm681, %v668, 0
        %v698 = vsel %vm681, %v669, 0
        %v701 = vsel %vm681, %v670, 0
        %v704 = vsel %vm681, %v671, 0
        %v707 = vsel %vm681, %v672, 0
        %v710 = vsel %vm681, %v673, 0
        %v713 = vsel %vm681, %v674, 0
        %v716 = vsel %vm681, %v675, 0
        %v719 = vsel %vm681, %v676, 0
        %v722 = vsel %vm681, %v677, 0
        %v725 = vsel %vm681, %v678, 0
        %v728 = vsel %vm681, %v679, 0
        %v731 = vsel %vm681, %v680, 0
        %733 = vmatprep.subr.bf16.mxu0 0
        %734 = vmatpush1.bf16.xpose.msra.mxu0 %v707
        %735 = vmatprep.subr.bf16.mxu0 0
        %736 = vmatpush1.bf16.xpose.msra.mxu0 %v704
        %737 = vmatprep.subr.bf16.mxu0 0
        %738 = vmatpush1.bf16.xpose.msra.mxu0 %v701
        %739 = vmatprep.subr.bf16.mxu0 0
        %740 = vmatpush1.bf16.xpose.msra.mxu0 %v698
        %741 = vmatprep.subr.bf16.mxu0 0
        %742 = vmatpush1.bf16.xpose.msra.mxu0 %v695
        %743 = vmatprep.subr.bf16.mxu0 0
        %744 = vmatpush1.bf16.xpose.msra.mxu0 %v692
        %745 = vmatprep.subr.bf16.mxu0 0
        %746 = vmatpush1.bf16.xpose.msra.mxu0 %v689
        %747 = vmatprep.subr.bf16.mxu0 0
        %748 = vmatpush1.bf16.xpose.msra.mxu0 %v686
        %749 = vmatprep.subr.bf16.mxu0 0
        %750 = vmatpush2.bf16.xpose.msra.mxu0 %v731
        %751 = vmatprep.subr.bf16.mxu0 0
        %752 = vmatpush2.bf16.xpose.msra.mxu0 %v728
        %753 = vmatprep.subr.bf16.mxu0 0
        %754 = vmatpush2.bf16.xpose.msra.mxu0 %v725
        %755 = vmatprep.subr.bf16.mxu0 0
        %756 = vmatpush2.bf16.xpose.msra.mxu0 %v722
        %757 = vmatprep.subr.bf16.mxu0 0
        %758 = vmatpush2.bf16.xpose.msra.mxu0 %v719
        %759 = vmatprep.subr.bf16.mxu0 0
        %760 = vmatpush2.bf16.xpose.msra.mxu0 %v716
        %761 = vmatprep.subr.bf16.mxu0 0
        %762 = vmatpush2.bf16.xpose.msra.mxu0 %v713
        %763 = vmatprep.subr.bf16.mxu0 0
        %764 = vmatpush2.bf16.xpose.msra.mxu0 %v710
        %765 = vmatprep.mubr.bf16.mxu0 0
        %766 = vmatmul.mubr.bf16.gmra.mxu0 %v683
        %v767 = vpop.f32.mrf.mxu0
        %v768 = vadd.f32 0.0, %v767
        %v769 = vpop.f32.mrf.mxu0
        %v770 = vadd.f32 0.0, %v769
        %v771 = vpop.f32.mrf.mxu0
        %v772 = vadd.f32 0.0, %v771
        %v773 = vpop.f32.mrf.mxu0
        %v774 = vadd.f32 0.0, %v773
        %775 = vdwg.mxu0
        %v808 = vunpack.c.l.b16 %v189
        %v809 = vunpack.c.l.b16 %v190
        %v810 = vunpack.c.l.b16 %v191
        %v811 = vunpack.c.l.b16 %v192
        %v812 = vunpack.c.l.b16 %v193
        %v813 = vunpack.c.l.b16 %v194
        %v814 = vunpack.c.l.b16 %v195
        %v815 = vunpack.c.l.b16 %v196
        %v816 = vunpack.c.l.b16 %v197
        %v817 = vunpack.c.l.b16 %v198
        %v818 = vunpack.c.l.b16 %v199
        %v819 = vunpack.c.l.b16 %v200
        %v820 = vunpack.c.l.b16 %v201
        %v821 = vunpack.c.l.b16 %v202
        %v822 = vunpack.c.l.b16 %v203
        %v823 = vunpack.c.l.b16 %v204
        %v824 = vunpack.c.l.b16 %v205
        %v825 = vunpack.c.l.b16 %v206
        %v826 = vunpack.c.l.b16 %v207
        %v827 = vunpack.c.l.b16 %v208
        %v828 = vunpack.c.l.b16 %v209
        %v829 = vunpack.c.l.b16 %v210
        %v830 = vunpack.c.l.b16 %v211
        %v831 = vunpack.c.l.b16 %v212
        %v832 = vunpack.c.l.b16 %v213
        %v833 = vunpack.c.l.b16 %v214
        %v834 = vunpack.c.l.b16 %v215
        %v835 = vunpack.c.l.b16 %v216
        %v836 = vunpack.c.l.b16 %v217
        %v837 = vunpack.c.l.b16 %v218
        %v838 = vunpack.c.l.b16 %v219
        %v839 = vunpack.c.l.b16 %v220
        %v840 = vpack.c.b16 %v809, %v808
        %v841 = vpack.c.b16 %v811, %v810
        %v842 = vpack.c.b16 %v813, %v812
        %v843 = vpack.c.b16 %v815, %v814
        %v844 = vpack.c.b16 %v817, %v816
        %v845 = vpack.c.b16 %v819, %v818
        %v846 = vpack.c.b16 %v821, %v820
        %v847 = vpack.c.b16 %v823, %v822
        %v848 = vpack.c.b16 %v825, %v824
        %v849 = vpack.c.b16 %v827, %v826
        %v850 = vpack.c.b16 %v829, %v828
        %v851 = vpack.c.b16 %v831, %v830
        %v852 = vpack.c.b16 %v833, %v832
        %v853 = vpack.c.b16 %v835, %v834
        %v854 = vpack.c.b16 %v837, %v836
        %v855 = vpack.c.b16 %v839, %v838
        %v857 = vsel %vm681, %v630, 0
        %v860 = vsel %vm681, %v840, 0
        %v863 = vsel %vm681, %v841, 0
        %v866 = vsel %vm681, %v842, 0
        %v869 = vsel %vm681, %v843, 0
        %v872 = vsel %vm681, %v844, 0
        %v875 = vsel %vm681, %v845, 0
        %v878 = vsel %vm681, %v846, 0
        %v881 = vsel %vm681, %v847, 0
        %v884 = vsel %vm681, %v848, 0
        %v887 = vsel %vm681, %v849, 0
        %v890 = vsel %vm681, %v850, 0
        %v893 = vsel %vm681, %v851, 0
        %v896 = vsel %vm681, %v852, 0
        %v899 = vsel %vm681, %v853, 0
        %v902 = vsel %vm681, %v854, 0
        %v905 = vsel %vm681, %v855, 0
        %907 = vmatprep.subr.bf16.mxu0 0
        %908 = vmatpush1.bf16.xpose.msra.mxu0 %v881
        %909 = vmatprep.subr.bf16.mxu0 0
        %910 = vmatpush1.bf16.xpose.msra.mxu0 %v878
        %911 = vmatprep.subr.bf16.mxu0 0
        %912 = vmatpush1.bf16.xpose.msra.mxu0 %v875
        %913 = vmatprep.subr.bf16.mxu0 0
        %914 = vmatpush1.bf16.xpose.msra.mxu0 %v872
        %915 = vmatprep.subr.bf16.mxu0 0
        %916 = vmatpush1.bf16.xpose.msra.mxu0 %v869
        %917 = vmatprep.subr.bf16.mxu0 0
        %918 = vmatpush1.bf16.xpose.msra.mxu0 %v866
        %919 = vmatprep.subr.bf16.mxu0 0
        %920 = vmatpush1.bf16.xpose.msra.mxu0 %v863
        %921 = vmatprep.subr.bf16.mxu0 0
        %922 = vmatpush1.bf16.xpose.msra.mxu0 %v860
        %923 = vmatprep.subr.bf16.mxu0 0
        %924 = vmatpush2.bf16.xpose.msra.mxu0 %v905
        %925 = vmatprep.subr.bf16.mxu0 0
        %926 = vmatpush2.bf16.xpose.msra.mxu0 %v902
        %927 = vmatprep.subr.bf16.mxu0 0
        %928 = vmatpush2.bf16.xpose.msra.mxu0 %v899
        %929 = vmatprep.subr.bf16.mxu0 0
        %930 = vmatpush2.bf16.xpose.msra.mxu0 %v896
        %931 = vmatprep.subr.bf16.mxu0 0
        %932 = vmatpush2.bf16.xpose.msra.mxu0 %v893
        %933 = vmatprep.subr.bf16.mxu0 0
        %934 = vmatpush2.bf16.xpose.msra.mxu0 %v890
        %935 = vmatprep.subr.bf16.mxu0 0
        %936 = vmatpush2.bf16.xpose.msra.mxu0 %v887
        %937 = vmatprep.subr.bf16.mxu0 0
        %938 = vmatpush2.bf16.xpose.msra.mxu0 %v884
        %939 = vmatprep.mubr.bf16.mxu0 0
        %940 = vmatmul.mubr.bf16.gmra.mxu0 %v857
        %v941 = vpop.f32.mrf.mxu0
        %v942 = vadd.f32 %v768, %v941
        %v943 = vpop.f32.mrf.mxu0
        %v944 = vadd.f32 %v770, %v943
        %v945 = vpop.f32.mrf.mxu0
        %v946 = vadd.f32 %v772, %v945
        %v947 = vpop.f32.mrf.mxu0
        %v948 = vadd.f32 %v774, %v947
        %949 = vdwg.mxu0
        %v950 = vld [vmem:[%s188] sm:$0xe]
        %v951 = vld [vmem:[%s188 + $0xc] sm:$0xe]
        %v952 = vld [vmem:[%s188 + $0x18] sm:$0xe]
        %v953 = vld [vmem:[%s188 + $0x24] sm:$0xe]
        %v954 = vld [vmem:[%s188 + $0x30] sm:$0xe]
        %v955 = vld [vmem:[%s188 + $0x3c] sm:$0xe]
        %v956 = vld [vmem:[%s188 + $0x48] sm:$0xe]
        %v957 = vld [vmem:[%s188 + $0x54] sm:$0xe]
        %v958 = vld [vmem:[%s188 + $0x60] sm:$0xe]
        %v959 = vld [vmem:[%s188 + $0x6c] sm:$0xe]
        %v960 = vld [vmem:[%s188 + $0x78] sm:$0xe]
        %v961 = vld [vmem:[%s188 + $0x84] sm:$0xe]
        %v962 = vld [vmem:[%s188 + $0x90] sm:$0xe]
        %v963 = vld [vmem:[%s188 + $0x9c] sm:$0xe]
        %v964 = vld [vmem:[%s188 + $0xa8] sm:$0xe]
        %v965 = vld [vmem:[%s188 + $0xb4] sm:$0xe]
        %vm998 = vcmask 1042432
        %vm999 = vcmask 1046532
        %vm1000 = vmor %vm998, %vm999
        %v1001 = vrot.slane %v950, 5
        %v1002 = vrot.slane %v1001, 4
        %v1003 = vrot.slane %v190, 5
        %v1004 = vsel %vm1000, %v1002, %v1003
        %v1005 = vrot.slane %v1003, 4
        %v1006 = vrot.slane %v223, 5
        %v1007 = vsel %vm1000, %v1005, %v1006
        %v1008 = vrot.slane %v951, 5
        %v1009 = vrot.slane %v1008, 4
        %v1010 = vrot.slane %v192, 5
        %v1011 = vsel %vm1000, %v1009, %v1010
        %v1012 = vrot.slane %v1010, 4
        %v1013 = vrot.slane %v224, 5
        %v1014 = vsel %vm1000, %v1012, %v1013
        %v1015 = vrot.slane %v952, 5
        %v1016 = vrot.slane %v1015, 4
        %v1017 = vrot.slane %v194, 5
        %v1018 = vsel %vm1000, %v1016, %v1017
        %v1019 = vrot.slane %v1017, 4
        %v1020 = vrot.slane %v225, 5
        %v1021 = vsel %vm1000, %v1019, %v1020
        %v1022 = vrot.slane %v953, 5
        %v1023 = vrot.slane %v1022, 4
        %v1024 = vrot.slane %v196, 5
        %v1025 = vsel %vm1000, %v1023, %v1024
        %v1026 = vrot.slane %v1024, 4
        %v1027 = vrot.slane %v226, 5
        %v1028 = vsel %vm1000, %v1026, %v1027
        %v1029 = vrot.slane %v954, 5
        %v1030 = vrot.slane %v1029, 4
        %v1031 = vrot.slane %v198, 5
        %v1032 = vsel %vm1000, %v1030, %v1031
        %v1033 = vrot.slane %v1031, 4
        %v1034 = vrot.slane %v227, 5
        %v1035 = vsel %vm1000, %v1033, %v1034
        %v1036 = vrot.slane %v955, 5
        %v1037 = vrot.slane %v1036, 4
        %v1038 = vrot.slane %v200, 5
        %v1039 = vsel %vm1000, %v1037, %v1038
        %v1040 = vrot.slane %v1038, 4
        %v1041 = vrot.slane %v228, 5
        %v1042 = vsel %vm1000, %v1040, %v1041
        %v1043 = vrot.slane %v956, 5
        %v1044 = vrot.slane %v1043, 4
        %v1045 = vrot.slane %v202, 5
        %v1046 = vsel %vm1000, %v1044, %v1045
        %v1047 = vrot.slane %v1045, 4
        %v1048 = vrot.slane %v229, 5
        %v1049 = vsel %vm1000, %v1047, %v1048
        %v1050 = vrot.slane %v957, 5
        %v1051 = vrot.slane %v1050, 4
        %v1052 = vrot.slane %v204, 5
        %v1053 = vsel %vm1000, %v1051, %v1052
        %v1054 = vrot.slane %v1052, 4
        %v1055 = vrot.slane %v230, 5
        %v1056 = vsel %vm1000, %v1054, %v1055
        %v1057 = vrot.slane %v958, 5
        %v1058 = vrot.slane %v1057, 4
        %v1059 = vrot.slane %v206, 5
        %v1060 = vsel %vm1000, %v1058, %v1059
        %v1061 = vrot.slane %v1059, 4
        %v1062 = vrot.slane %v231, 5
        %v1063 = vsel %vm1000, %v1061, %v1062
        %v1064 = vrot.slane %v959, 5
        %v1065 = vrot.slane %v1064, 4
        %v1066 = vrot.slane %v208, 5
        %v1067 = vsel %vm1000, %v1065, %v1066
        %v1068 = vrot.slane %v1066, 4
        %v1069 = vrot.slane %v232, 5
        %v1070 = vsel %vm1000, %v1068, %v1069
        %v1071 = vrot.slane %v960, 5
        %v1072 = vrot.slane %v1071, 4
        %v1073 = vrot.slane %v210, 5
        %v1074 = vsel %vm1000, %v1072, %v1073
        %v1075 = vrot.slane %v1073, 4
        %v1076 = vrot.slane %v233, 5
        %v1077 = vsel %vm1000, %v1075, %v1076
        %v1078 = vrot.slane %v961, 5
        %v1079 = vrot.slane %v1078, 4
        %v1080 = vrot.slane %v212, 5
        %v1081 = vsel %vm1000, %v1079, %v1080
        %v1082 = vrot.slane %v1080, 4
        %v1083 = vrot.slane %v234, 5
        %v1084 = vsel %vm1000, %v1082, %v1083
        %v1085 = vrot.slane %v962, 5
        %v1086 = vrot.slane %v1085, 4
        %v1087 = vrot.slane %v214, 5
        %v1088 = vsel %vm1000, %v1086, %v1087
        %v1089 = vrot.slane %v1087, 4
        %v1090 = vrot.slane %v235, 5
        %v1091 = vsel %vm1000, %v1089, %v1090
        %v1092 = vrot.slane %v963, 5
        %v1093 = vrot.slane %v1092, 4
        %v1094 = vrot.slane %v216, 5
        %v1095 = vsel %vm1000, %v1093, %v1094
        %v1096 = vrot.slane %v1094, 4
        %v1097 = vrot.slane %v236, 5
        %v1098 = vsel %vm1000, %v1096, %v1097
        %v1099 = vrot.slane %v964, 5
        %v1100 = vrot.slane %v1099, 4
        %v1101 = vrot.slane %v218, 5
        %v1102 = vsel %vm1000, %v1100, %v1101
        %v1103 = vrot.slane %v1101, 4
        %v1104 = vrot.slane %v237, 5
        %v1105 = vsel %vm1000, %v1103, %v1104
        %v1106 = vrot.slane %v965, 5
        %v1107 = vrot.slane %v1106, 4
        %v1108 = vrot.slane %v220, 5
        %v1109 = vsel %vm1000, %v1107, %v1108
        %v1110 = vrot.slane %v1108, 4
        %v1111 = vrot.slane %v238, 5
        %v1112 = vsel %vm1000, %v1110, %v1111
        %1113 = vrot.lane.b32.xlu0 %v630, 120
        %v1114 = vpop.permute.xlu0 %1113
        %v1115 = vunpack.c.l.b16 %v1004
        %v1116 = vunpack.c.l.b16 %v1007
        %v1117 = vunpack.c.l.b16 %v1011
        %v1118 = vunpack.c.l.b16 %v1014
        %v1119 = vunpack.c.l.b16 %v1018
        %v1120 = vunpack.c.l.b16 %v1021
        %v1121 = vunpack.c.l.b16 %v1025
        %v1122 = vunpack.c.l.b16 %v1028
        %v1123 = vunpack.c.l.b16 %v1032
        %v1124 = vunpack.c.l.b16 %v1035
        %v1125 = vunpack.c.l.b16 %v1039
        %v1126 = vunpack.c.l.b16 %v1042
        %v1127 = vunpack.c.l.b16 %v1046
        %v1128 = vunpack.c.l.b16 %v1049
        %v1129 = vunpack.c.l.b16 %v1053
        %v1130 = vunpack.c.l.b16 %v1056
        %v1131 = vunpack.c.l.b16 %v1060
        %v1132 = vunpack.c.l.b16 %v1063
        %v1133 = vunpack.c.l.b16 %v1067
        %v1134 = vunpack.c.l.b16 %v1070
        %v1135 = vunpack.c.l.b16 %v1074
        %v1136 = vunpack.c.l.b16 %v1077
        %v1137 = vunpack.c.l.b16 %v1081
        %v1138 = vunpack.c.l.b16 %v1084
        %v1139 = vunpack.c.l.b16 %v1088
        %v1140 = vunpack.c.l.b16 %v1091
        %v1141 = vunpack.c.l.b16 %v1095
        %v1142 = vunpack.c.l.b16 %v1098
        %v1143 = vunpack.c.l.b16 %v1102
        %v1144 = vunpack.c.l.b16 %v1105
        %v1145 = vunpack.c.l.b16 %v1109
        %v1146 = vunpack.c.l.b16 %v1112
        %v1147 = vpack.c.b16 %v1116, %v1115
        %v1148 = vpack.c.b16 %v1118, %v1117
        %v1149 = vpack.c.b16 %v1120, %v1119
        %v1150 = vpack.c.b16 %v1122, %v1121
        %v1151 = vpack.c.b16 %v1124, %v1123
        %v1152 = vpack.c.b16 %v1126, %v1125
        %v1153 = vpack.c.b16 %v1128, %v1127
        %v1154 = vpack.c.b16 %v1130, %v1129
        %v1155 = vpack.c.b16 %v1132, %v1131
        %v1156 = vpack.c.b16 %v1134, %v1133
        %v1157 = vpack.c.b16 %v1136, %v1135
        %v1158 = vpack.c.b16 %v1138, %v1137
        %v1159 = vpack.c.b16 %v1140, %v1139
        %v1160 = vpack.c.b16 %v1142, %v1141
        %v1161 = vpack.c.b16 %v1144, %v1143
        %v1162 = vpack.c.b16 %v1146, %v1145
        %v1164 = vsel %vm681, %v1114, 0
        %v1167 = vsel %vm681, %v1147, 0
        %v1170 = vsel %vm681, %v1148, 0
        %v1173 = vsel %vm681, %v1149, 0
        %v1176 = vsel %vm681, %v1150, 0
        %v1179 = vsel %vm681, %v1151, 0
        %v1182 = vsel %vm681, %v1152, 0
        %v1185 = vsel %vm681, %v1153, 0
        %v1188 = vsel %vm681, %v1154, 0
        %v1191 = vsel %vm681, %v1155, 0
        %v1194 = vsel %vm681, %v1156, 0
        %v1197 = vsel %vm681, %v1157, 0
        %v1200 = vsel %vm681, %v1158, 0
        %v1203 = vsel %vm681, %v1159, 0
        %v1206 = vsel %vm681, %v1160, 0
        %v1209 = vsel %vm681, %v1161, 0
        %v1212 = vsel %vm681, %v1162, 0
        %1214 = vmatprep.subr.bf16.mxu0 0
        %1215 = vmatpush1.bf16.xpose.msra.mxu0 %v1188
        %1216 = vmatprep.subr.bf16.mxu0 0
        %1217 = vmatpush1.bf16.xpose.msra.mxu0 %v1185
        %1218 = vmatprep.subr.bf16.mxu0 0
        %1219 = vmatpush1.bf16.xpose.msra.mxu0 %v1182
        %1220 = vmatprep.subr.bf16.mxu0 0
        %1221 = vmatpush1.bf16.xpose.msra.mxu0 %v1179
        %1222 = vmatprep.subr.bf16.mxu0 0
        %1223 = vmatpush1.bf16.xpose.msra.mxu0 %v1176
        %1224 = vmatprep.subr.bf16.mxu0 0
        %1225 = vmatpush1.bf16.xpose.msra.mxu0 %v1173
        %1226 = vmatprep.subr.bf16.mxu0 0
        %1227 = vmatpush1.bf16.xpose.msra.mxu0 %v1170
        %1228 = vmatprep.subr.bf16.mxu0 0
        %1229 = vmatpush1.bf16.xpose.msra.mxu0 %v1167
        %1230 = vmatprep.subr.bf16.mxu0 0
        %1231 = vmatpush2.bf16.xpose.msra.mxu0 %v1212
        %1232 = vmatprep.subr.bf16.mxu0 0
        %1233 = vmatpush2.bf16.xpose.msra.mxu0 %v1209
        %1234 = vmatprep.subr.bf16.mxu0 0
        %1235 = vmatpush2.bf16.xpose.msra.mxu0 %v1206
        %1236 = vmatprep.subr.bf16.mxu0 0
        %1237 = vmatpush2.bf16.xpose.msra.mxu0 %v1203
        %1238 = vmatprep.subr.bf16.mxu0 0
        %1239 = vmatpush2.bf16.xpose.msra.mxu0 %v1200
        %1240 = vmatprep.subr.bf16.mxu0 0
        %1241 = vmatpush2.bf16.xpose.msra.mxu0 %v1197
        %1242 = vmatprep.subr.bf16.mxu0 0
        %1243 = vmatpush2.bf16.xpose.msra.mxu0 %v1194
        %1244 = vmatprep.subr.bf16.mxu0 0
        %1245 = vmatpush2.bf16.xpose.msra.mxu0 %v1191
        %1246 = vmatprep.mubr.bf16.mxu0 0
        %1247 = vmatmul.mubr.bf16.gmra.mxu0 %v1164
        %v1248 = vpop.f32.mrf.mxu0
        %v1249 = vadd.f32 0.0, %v1248
        %v1250 = vpop.f32.mrf.mxu0
        %v1251 = vadd.f32 0.0, %v1250
        %v1252 = vpop.f32.mrf.mxu0
        %v1253 = vadd.f32 0.0, %v1252
        %v1254 = vpop.f32.mrf.mxu0
        %v1255 = vadd.f32 0.0, %v1254
        %1256 = vdwg.mxu0
        %v1257 = vadd.f32 %v942, %v1249
        %v1258 = vadd.f32 %v944, %v1251
        %v1259 = vadd.f32 %v946, %v1253
        %v1260 = vadd.f32 %v948, %v1255
        %s1261 = sadd.s32 %s185, 1
        %s1262 = smul.u32 %s1261, 3
        %s1263 = smul.addr %s1262, 4
        %s1264 = scalar_lea.vmem %s182, %s1263
        %v1265 = vld [vmem:[%s1264] sm:$0xf]
        %v1266 = vld [vmem:[%s1264 + $0x4] sm:$0xf]
        %v1267 = vld [vmem:[%s1264 + $0xc] sm:$0xf]
        %v1268 = vld [vmem:[%s1264 + $0x10] sm:$0xf]
        %v1269 = vld [vmem:[%s1264 + $0x18] sm:$0xf]
        %v1270 = vld [vmem:[%s1264 + $0x1c] sm:$0xf]
        %v1271 = vld [vmem:[%s1264 + $0x24] sm:$0xf]
        %v1272 = vld [vmem:[%s1264 + $0x28] sm:$0xf]
        %v1273 = vld [vmem:[%s1264 + $0x30] sm:$0xf]
        %v1274 = vld [vmem:[%s1264 + $0x34] sm:$0xf]
        %v1275 = vld [vmem:[%s1264 + $0x3c] sm:$0xf]
        %v1276 = vld [vmem:[%s1264 + $0x40] sm:$0xf]
        %v1277 = vld [vmem:[%s1264 + $0x48] sm:$0xf]
        %v1278 = vld [vmem:[%s1264 + $0x4c] sm:$0xf]
        %v1279 = vld [vmem:[%s1264 + $0x54] sm:$0xf]
        %v1280 = vld [vmem:[%s1264 + $0x58] sm:$0xf]
        %v1281 = vld [vmem:[%s1264 + $0x60] sm:$0xf]
        %v1282 = vld [vmem:[%s1264 + $0x64] sm:$0xf]
        %v1283 = vld [vmem:[%s1264 + $0x6c] sm:$0xf]
        %v1284 = vld [vmem:[%s1264 + $0x70] sm:$0xf]
        %v1285 = vld [vmem:[%s1264 + $0x78] sm:$0xf]
        %v1286 = vld [vmem:[%s1264 + $0x7c] sm:$0xf]
        %v1287 = vld [vmem:[%s1264 + $0x84] sm:$0xf]
        %v1288 = vld [vmem:[%s1264 + $0x88] sm:$0xf]
        %v1289 = vld [vmem:[%s1264 + $0x90] sm:$0xf]
        %v1290 = vld [vmem:[%s1264 + $0x94] sm:$0xf]
        %v1291 = vld [vmem:[%s1264 + $0x9c] sm:$0xf]
        %v1292 = vld [vmem:[%s1264 + $0xa0] sm:$0xf]
        %v1293 = vld [vmem:[%s1264 + $0xa8] sm:$0xf]
        %v1294 = vld [vmem:[%s1264 + $0xac] sm:$0xf]
        %v1295 = vld [vmem:[%s1264 + $0xb4] sm:$0xf]
        %v1296 = vld [vmem:[%s1264 + $0xb8] sm:$0xf]
        %1297 = vrot.lane.b32.xlu0 %v630, 116
        %v1298 = vpop.permute.xlu0 %1297
        %v1331 = vunpack.c.l.b16 %v1265
        %v1332 = vunpack.c.l.b16 %v1266
        %v1333 = vunpack.c.l.b16 %v1267
        %v1334 = vunpack.c.l.b16 %v1268
        %v1335 = vunpack.c.l.b16 %v1269
        %v1336 = vunpack.c.l.b16 %v1270
        %v1337 = vunpack.c.l.b16 %v1271
        %v1338 = vunpack.c.l.b16 %v1272
        %v1339 = vunpack.c.l.b16 %v1273
        %v1340 = vunpack.c.l.b16 %v1274
        %v1341 = vunpack.c.l.b16 %v1275
        %v1342 = vunpack.c.l.b16 %v1276
        %v1343 = vunpack.c.l.b16 %v1277
        %v1344 = vunpack.c.l.b16 %v1278
        %v1345 = vunpack.c.l.b16 %v1279
        %v1346 = vunpack.c.l.b16 %v1280
        %v1347 = vunpack.c.l.b16 %v1281
        %v1348 = vunpack.c.l.b16 %v1282
        %v1349 = vunpack.c.l.b16 %v1283
        %v1350 = vunpack.c.l.b16 %v1284
        %v1351 = vunpack.c.l.b16 %v1285
        %v1352 = vunpack.c.l.b16 %v1286
        %v1353 = vunpack.c.l.b16 %v1287
        %v1354 = vunpack.c.l.b16 %v1288
        %v1355 = vunpack.c.l.b16 %v1289
        %v1356 = vunpack.c.l.b16 %v1290
        %v1357 = vunpack.c.l.b16 %v1291
        %v1358 = vunpack.c.l.b16 %v1292
        %v1359 = vunpack.c.l.b16 %v1293
        %v1360 = vunpack.c.l.b16 %v1294
        %v1361 = vunpack.c.l.b16 %v1295
        %v1362 = vunpack.c.l.b16 %v1296
        %v1363 = vpack.c.b16 %v1332, %v1331
        %v1364 = vpack.c.b16 %v1334, %v1333
        %v1365 = vpack.c.b16 %v1336, %v1335
        %v1366 = vpack.c.b16 %v1338, %v1337
        %v1367 = vpack.c.b16 %v1340, %v1339
        %v1368 = vpack.c.b16 %v1342, %v1341
        %v1369 = vpack.c.b16 %v1344, %v1343
        %v1370 = vpack.c.b16 %v1346, %v1345
        %v1371 = vpack.c.b16 %v1348, %v1347
        %v1372 = vpack.c.b16 %v1350, %v1349
        %v1373 = vpack.c.b16 %v1352, %v1351
        %v1374 = vpack.c.b16 %v1354, %v1353
        %v1375 = vpack.c.b16 %v1356, %v1355
        %v1376 = vpack.c.b16 %v1358, %v1357
        %v1377 = vpack.c.b16 %v1360, %v1359
        %v1378 = vpack.c.b16 %v1362, %v1361
        %v1380 = vsel %vm681, %v1298, 0
        %v1383 = vsel %vm681, %v1363, 0
        %v1386 = vsel %vm681, %v1364, 0
        %v1389 = vsel %vm681, %v1365, 0
        %v1392 = vsel %vm681, %v1366, 0
        %v1395 = vsel %vm681, %v1367, 0
        %v1398 = vsel %vm681, %v1368, 0
        %v1401 = vsel %vm681, %v1369, 0
        %v1404 = vsel %vm681, %v1370, 0
        %v1407 = vsel %vm681, %v1371, 0
        %v1410 = vsel %vm681, %v1372, 0
        %v1413 = vsel %vm681, %v1373, 0
        %v1416 = vsel %vm681, %v1374, 0
        %v1419 = vsel %vm681, %v1375, 0
        %v1422 = vsel %vm681, %v1376, 0
        %v1425 = vsel %vm681, %v1377, 0
        %v1428 = vsel %vm681, %v1378, 0
        %1430 = vmatprep.subr.bf16.mxu0 0
        %1431 = vmatpush1.bf16.xpose.msra.mxu0 %v1404
        %1432 = vmatprep.subr.bf16.mxu0 0
        %1433 = vmatpush1.bf16.xpose.msra.mxu0 %v1401
        %1434 = vmatprep.subr.bf16.mxu0 0
        %1435 = vmatpush1.bf16.xpose.msra.mxu0 %v1398
        %1436 = vmatprep.subr.bf16.mxu0 0
        %1437 = vmatpush1.bf16.xpose.msra.mxu0 %v1395
        %1438 = vmatprep.subr.bf16.mxu0 0
        %1439 = vmatpush1.bf16.xpose.msra.mxu0 %v1392
        %1440 = vmatprep.subr.bf16.mxu0 0
        %1441 = vmatpush1.bf16.xpose.msra.mxu0 %v1389
        %1442 = vmatprep.subr.bf16.mxu0 0
        %1443 = vmatpush1.bf16.xpose.msra.mxu0 %v1386
        %1444 = vmatprep.subr.bf16.mxu0 0
        %1445 = vmatpush1.bf16.xpose.msra.mxu0 %v1383
        %1446 = vmatprep.subr.bf16.mxu0 0
        %1447 = vmatpush2.bf16.xpose.msra.mxu0 %v1428
        %1448 = vmatprep.subr.bf16.mxu0 0
        %1449 = vmatpush2.bf16.xpose.msra.mxu0 %v1425
        %1450 = vmatprep.subr.bf16.mxu0 0
        %1451 = vmatpush2.bf16.xpose.msra.mxu0 %v1422
        %1452 = vmatprep.subr.bf16.mxu0 0
        %1453 = vmatpush2.bf16.xpose.msra.mxu0 %v1419
        %1454 = vmatprep.subr.bf16.mxu0 0
        %1455 = vmatpush2.bf16.xpose.msra.mxu0 %v1416
        %1456 = vmatprep.subr.bf16.mxu0 0
        %1457 = vmatpush2.bf16.xpose.msra.mxu0 %v1413
        %1458 = vmatprep.subr.bf16.mxu0 0
        %1459 = vmatpush2.bf16.xpose.msra.mxu0 %v1410
        %1460 = vmatprep.subr.bf16.mxu0 0
        %1461 = vmatpush2.bf16.xpose.msra.mxu0 %v1407
        %1462 = vmatprep.mubr.bf16.mxu0 0
        %1463 = vmatmul.mubr.bf16.gmra.mxu0 %v1380
        %v1464 = vpop.f32.mrf.mxu0
        %v1465 = vadd.f32 0.0, %v1464
        %v1466 = vpop.f32.mrf.mxu0
        %v1467 = vadd.f32 0.0, %v1466
        %v1468 = vpop.f32.mrf.mxu0
        %v1469 = vadd.f32 0.0, %v1468
        %v1470 = vpop.f32.mrf.mxu0
        %v1471 = vadd.f32 0.0, %v1470
        %1472 = vdwg.mxu0
        %v1473 = vadd.f32 %v1257, %v1465
        %v1474 = vadd.f32 %v1258, %v1467
        %v1475 = vadd.f32 %v1259, %v1469
        %v1476 = vadd.f32 %v1260, %v1471
        %v1477 = vld [vmem:[%s1264] sm:$0xf]
        %v1478 = vld [vmem:[%s1264 + $0x4] sm:$0xf]
        %v1479 = vld [vmem:[%s1264 + $0x8] sm:$0x1]
        %v1480 = vld [vmem:[%s1264 + $0xc] sm:$0xf]
        %v1481 = vld [vmem:[%s1264 + $0x10] sm:$0xf]
        %v1482 = vld [vmem:[%s1264 + $0x14] sm:$0x1]
        %v1483 = vld [vmem:[%s1264 + $0x18] sm:$0xf]
        %v1484 = vld [vmem:[%s1264 + $0x1c] sm:$0xf]
        %v1485 = vld [vmem:[%s1264 + $0x20] sm:$0x1]
        %v1486 = vld [vmem:[%s1264 + $0x24] sm:$0xf]
        %v1487 = vld [vmem:[%s1264 + $0x28] sm:$0xf]
        %v1488 = vld [vmem:[%s1264 + $0x2c] sm:$0x1]
        %v1489 = vld [vmem:[%s1264 + $0x30] sm:$0xf]
        %v1490 = vld [vmem:[%s1264 + $0x34] sm:$0xf]
        %v1491 = vld [vmem:[%s1264 + $0x38] sm:$0x1]
        %v1492 = vld [vmem:[%s1264 + $0x3c] sm:$0xf]
        %v1493 = vld [vmem:[%s1264 + $0x40] sm:$0xf]
        %v1494 = vld [vmem:[%s1264 + $0x44] sm:$0x1]
        %v1495 = vld [vmem:[%s1264 + $0x48] sm:$0xf]
        %v1496 = vld [vmem:[%s1264 + $0x4c] sm:$0xf]
        %v1497 = vld [vmem:[%s1264 + $0x50] sm:$0x1]
        %v1498 = vld [vmem:[%s1264 + $0x54] sm:$0xf]
        %v1499 = vld [vmem:[%s1264 + $0x58] sm:$0xf]
        %v1500 = vld [vmem:[%s1264 + $0x5c] sm:$0x1]
        %v1501 = vld [vmem:[%s1264 + $0x60] sm:$0xf]
        %v1502 = vld [vmem:[%s1264 + $0x64] sm:$0xf]
        %v1503 = vld [vmem:[%s1264 + $0x68] sm:$0x1]
        %v1504 = vld [vmem:[%s1264 + $0x6c] sm:$0xf]
        %v1505 = vld [vmem:[%s1264 + $0x70] sm:$0xf]
        %v1506 = vld [vmem:[%s1264 + $0x74] sm:$0x1]
        %v1507 = vld [vmem:[%s1264 + $0x78] sm:$0xf]
        %v1508 = vld [vmem:[%s1264 + $0x7c] sm:$0xf]
        %v1509 = vld [vmem:[%s1264 + $0x80] sm:$0x1]
        %v1510 = vld [vmem:[%s1264 + $0x84] sm:$0xf]
        %v1511 = vld [vmem:[%s1264 + $0x88] sm:$0xf]
        %v1512 = vld [vmem:[%s1264 + $0x8c] sm:$0x1]
        %v1513 = vld [vmem:[%s1264 + $0x90] sm:$0xf]
        %v1514 = vld [vmem:[%s1264 + $0x94] sm:$0xf]
        %v1515 = vld [vmem:[%s1264 + $0x98] sm:$0x1]
        %v1516 = vld [vmem:[%s1264 + $0x9c] sm:$0xf]
        %v1517 = vld [vmem:[%s1264 + $0xa0] sm:$0xf]
        %v1518 = vld [vmem:[%s1264 + $0xa4] sm:$0x1]
        %v1519 = vld [vmem:[%s1264 + $0xa8] sm:$0xf]
        %v1520 = vld [vmem:[%s1264 + $0xac] sm:$0xf]
        %v1521 = vld [vmem:[%s1264 + $0xb0] sm:$0x1]
        %v1522 = vld [vmem:[%s1264 + $0xb4] sm:$0xf]
        %v1523 = vld [vmem:[%s1264 + $0xb8] sm:$0xf]
        %v1524 = vld [vmem:[%s1264 + $0xbc] sm:$0x1]
        %v1526 = vshrl.u32 %v1477, 16
        %v1528 = vrot.slane %v1526, 4
        %v1529 = vshll.u32 %v1477, 16
        %v1531 = vrot.slane %v1529, 5
        %v1532 = vor.u32 %v1528, %v1531
        %v1533 = vrot.slane %v1532, 4
        %v1535 = vshll.u32 %v1478, 16
        %v1537 = vrot.slane %v1535, 5
        %v1538 = vsel %vm241, %v1533, %v1537
        %v1539 = vshrl.u32 %v1478, 16
        %v1541 = vrot.slane %v1539, 4
        %v1542 = vor.u32 %v1541, %v1537
        %v1543 = vrot.slane %v1542, 4
        %v1545 = vshll.u32 %v1479, 16
        %v1547 = vrot.slane %v1545, 5
        %v1548 = vsel %vm241, %v1543, %v1547
        %v1550 = vshrl.u32 %v1480, 16
        %v1552 = vrot.slane %v1550, 4
        %v1553 = vshll.u32 %v1480, 16
        %v1555 = vrot.slane %v1553, 5
        %v1556 = vor.u32 %v1552, %v1555
        %v1557 = vrot.slane %v1556, 4
        %v1559 = vshll.u32 %v1481, 16
        %v1561 = vrot.slane %v1559, 5
        %v1562 = vsel %vm241, %v1557, %v1561
        %v1563 = vshrl.u32 %v1481, 16
        %v1565 = vrot.slane %v1563, 4
        %v1566 = vor.u32 %v1565, %v1561
        %v1567 = vrot.slane %v1566, 4
        %v1569 = vshll.u32 %v1482, 16
        %v1571 = vrot.slane %v1569, 5
        %v1572 = vsel %vm241, %v1567, %v1571
        %v1574 = vshrl.u32 %v1483, 16
        %v1576 = vrot.slane %v1574, 4
        %v1577 = vshll.u32 %v1483, 16
        %v1579 = vrot.slane %v1577, 5
        %v1580 = vor.u32 %v1576, %v1579
        %v1581 = vrot.slane %v1580, 4
        %v1583 = vshll.u32 %v1484, 16
        %v1585 = vrot.slane %v1583, 5
        %v1586 = vsel %vm241, %v1581, %v1585
        %v1587 = vshrl.u32 %v1484, 16
        %v1589 = vrot.slane %v1587, 4
        %v1590 = vor.u32 %v1589, %v1585
        %v1591 = vrot.slane %v1590, 4
        %v1593 = vshll.u32 %v1485, 16
        %v1595 = vrot.slane %v1593, 5
        %v1596 = vsel %vm241, %v1591, %v1595
        %v1598 = vshrl.u32 %v1486, 16
        %v1600 = vrot.slane %v1598, 4
        %v1601 = vshll.u32 %v1486, 16
        %v1603 = vrot.slane %v1601, 5
        %v1604 = vor.u32 %v1600, %v1603
        %v1605 = vrot.slane %v1604, 4
        %v1607 = vshll.u32 %v1487, 16
        %v1609 = vrot.slane %v1607, 5
        %v1610 = vsel %vm241, %v1605, %v1609
        %v1611 = vshrl.u32 %v1487, 16
        %v1613 = vrot.slane %v1611, 4
        %v1614 = vor.u32 %v1613, %v1609
        %v1615 = vrot.slane %v1614, 4
        %v1617 = vshll.u32 %v1488, 16
        %v1619 = vrot.slane %v1617, 5
        %v1620 = vsel %vm241, %v1615, %v1619
        %v1622 = vshrl.u32 %v1489, 16
        %v1624 = vrot.slane %v1622, 4
        %v1625 = vshll.u32 %v1489, 16
        %v1627 = vrot.slane %v1625, 5
        %v1628 = vor.u32 %v1624, %v1627
        %v1629 = vrot.slane %v1628, 4
        %v1631 = vshll.u32 %v1490, 16
        %v1633 = vrot.slane %v1631, 5
        %v1634 = vsel %vm241, %v1629, %v1633
        %v1635 = vshrl.u32 %v1490, 16
        %v1637 = vrot.slane %v1635, 4
        %v1638 = vor.u32 %v1637, %v1633
        %v1639 = vrot.slane %v1638, 4
        %v1641 = vshll.u32 %v1491, 16
        %v1643 = vrot.slane %v1641, 5
        %v1644 = vsel %vm241, %v1639, %v1643
        %v1646 = vshrl.u32 %v1492, 16
        %v1648 = vrot.slane %v1646, 4
        %v1649 = vshll.u32 %v1492, 16
        %v1651 = vrot.slane %v1649, 5
        %v1652 = vor.u32 %v1648, %v1651
        %v1653 = vrot.slane %v1652, 4
        %v1655 = vshll.u32 %v1493, 16
        %v1657 = vrot.slane %v1655, 5
        %v1658 = vsel %vm241, %v1653, %v1657
        %v1659 = vshrl.u32 %v1493, 16
        %v1661 = vrot.slane %v1659, 4
        %v1662 = vor.u32 %v1661, %v1657
        %v1663 = vrot.slane %v1662, 4
        %v1665 = vshll.u32 %v1494, 16
        %v1667 = vrot.slane %v1665, 5
        %v1668 = vsel %vm241, %v1663, %v1667
        %v1670 = vshrl.u32 %v1495, 16
        %v1672 = vrot.slane %v1670, 4
        %v1673 = vshll.u32 %v1495, 16
        %v1675 = vrot.slane %v1673, 5
        %v1676 = vor.u32 %v1672, %v1675
        %v1677 = vrot.slane %v1676, 4
        %v1679 = vshll.u32 %v1496, 16
        %v1681 = vrot.slane %v1679, 5
        %v1682 = vsel %vm241, %v1677, %v1681
        %v1683 = vshrl.u32 %v1496, 16
        %v1685 = vrot.slane %v1683, 4
        %v1686 = vor.u32 %v1685, %v1681
        %v1687 = vrot.slane %v1686, 4
        %v1689 = vshll.u32 %v1497, 16
        %v1691 = vrot.slane %v1689, 5
        %v1692 = vsel %vm241, %v1687, %v1691
        %v1694 = vshrl.u32 %v1498, 16
        %v1696 = vrot.slane %v1694, 4
        %v1697 = vshll.u32 %v1498, 16
        %v1699 = vrot.slane %v1697, 5
        %v1700 = vor.u32 %v1696, %v1699
        %v1701 = vrot.slane %v1700, 4
        %v1703 = vshll.u32 %v1499, 16
        %v1705 = vrot.slane %v1703, 5
        %v1706 = vsel %vm241, %v1701, %v1705
        %v1707 = vshrl.u32 %v1499, 16
        %v1709 = vrot.slane %v1707, 4
        %v1710 = vor.u32 %v1709, %v1705
        %v1711 = vrot.slane %v1710, 4
        %v1713 = vshll.u32 %v1500, 16
        %v1715 = vrot.slane %v1713, 5
        %v1716 = vsel %vm241, %v1711, %v1715
        %v1718 = vshrl.u32 %v1501, 16
        %v1720 = vrot.slane %v1718, 4
        %v1721 = vshll.u32 %v1501, 16
        %v1723 = vrot.slane %v1721, 5
        %v1724 = vor.u32 %v1720, %v1723
        %v1725 = vrot.slane %v1724, 4
        %v1727 = vshll.u32 %v1502, 16
        %v1729 = vrot.slane %v1727, 5
        %v1730 = vsel %vm241, %v1725, %v1729
        %v1731 = vshrl.u32 %v1502, 16
        %v1733 = vrot.slane %v1731, 4
        %v1734 = vor.u32 %v1733, %v1729
        %v1735 = vrot.slane %v1734, 4
        %v1737 = vshll.u32 %v1503, 16
        %v1739 = vrot.slane %v1737, 5
        %v1740 = vsel %vm241, %v1735, %v1739
        %v1742 = vshrl.u32 %v1504, 16
        %v1744 = vrot.slane %v1742, 4
        %v1745 = vshll.u32 %v1504, 16
        %v1747 = vrot.slane %v1745, 5
        %v1748 = vor.u32 %v1744, %v1747
        %v1749 = vrot.slane %v1748, 4
        %v1751 = vshll.u32 %v1505, 16
        %v1753 = vrot.slane %v1751, 5
        %v1754 = vsel %vm241, %v1749, %v1753
        %v1755 = vshrl.u32 %v1505, 16
        %v1757 = vrot.slane %v1755, 4
        %v1758 = vor.u32 %v1757, %v1753
        %v1759 = vrot.slane %v1758, 4
        %v1761 = vshll.u32 %v1506, 16
        %v1763 = vrot.slane %v1761, 5
        %v1764 = vsel %vm241, %v1759, %v1763
        %v1766 = vshrl.u32 %v1507, 16
        %v1768 = vrot.slane %v1766, 4
        %v1769 = vshll.u32 %v1507, 16
        %v1771 = vrot.slane %v1769, 5
        %v1772 = vor.u32 %v1768, %v1771
        %v1773 = vrot.slane %v1772, 4
        %v1775 = vshll.u32 %v1508, 16
        %v1777 = vrot.slane %v1775, 5
        %v1778 = vsel %vm241, %v1773, %v1777
        %v1779 = vshrl.u32 %v1508, 16
        %v1781 = vrot.slane %v1779, 4
        %v1782 = vor.u32 %v1781, %v1777
        %v1783 = vrot.slane %v1782, 4
        %v1785 = vshll.u32 %v1509, 16
        %v1787 = vrot.slane %v1785, 5
        %v1788 = vsel %vm241, %v1783, %v1787
        %v1790 = vshrl.u32 %v1510, 16
        %v1792 = vrot.slane %v1790, 4
        %v1793 = vshll.u32 %v1510, 16
        %v1795 = vrot.slane %v1793, 5
        %v1796 = vor.u32 %v1792, %v1795
        %v1797 = vrot.slane %v1796, 4
        %v1799 = vshll.u32 %v1511, 16
        %v1801 = vrot.slane %v1799, 5
        %v1802 = vsel %vm241, %v1797, %v1801
        %v1803 = vshrl.u32 %v1511, 16
        %v1805 = vrot.slane %v1803, 4
        %v1806 = vor.u32 %v1805, %v1801
        %v1807 = vrot.slane %v1806, 4
        %v1809 = vshll.u32 %v1512, 16
        %v1811 = vrot.slane %v1809, 5
        %v1812 = vsel %vm241, %v1807, %v1811
        %v1814 = vshrl.u32 %v1513, 16
        %v1816 = vrot.slane %v1814, 4
        %v1817 = vshll.u32 %v1513, 16
        %v1819 = vrot.slane %v1817, 5
        %v1820 = vor.u32 %v1816, %v1819
        %v1821 = vrot.slane %v1820, 4
        %v1823 = vshll.u32 %v1514, 16
        %v1825 = vrot.slane %v1823, 5
        %v1826 = vsel %vm241, %v1821, %v1825
        %v1827 = vshrl.u32 %v1514, 16
        %v1829 = vrot.slane %v1827, 4
        %v1830 = vor.u32 %v1829, %v1825
        %v1831 = vrot.slane %v1830, 4
        %v1833 = vshll.u32 %v1515, 16
        %v1835 = vrot.slane %v1833, 5
        %v1836 = vsel %vm241, %v1831, %v1835
        %v1838 = vshrl.u32 %v1516, 16
        %v1840 = vrot.slane %v1838, 4
        %v1841 = vshll.u32 %v1516, 16
        %v1843 = vrot.slane %v1841, 5
        %v1844 = vor.u32 %v1840, %v1843
        %v1845 = vrot.slane %v1844, 4
        %v1847 = vshll.u32 %v1517, 16
        %v1849 = vrot.slane %v1847, 5
        %v1850 = vsel %vm241, %v1845, %v1849
        %v1851 = vshrl.u32 %v1517, 16
        %v1853 = vrot.slane %v1851, 4
        %v1854 = vor.u32 %v1853, %v1849
        %v1855 = vrot.slane %v1854, 4
        %v1857 = vshll.u32 %v1518, 16
        %v1859 = vrot.slane %v1857, 5
        %v1860 = vsel %vm241, %v1855, %v1859
        %v1862 = vshrl.u32 %v1519, 16
        %v1864 = vrot.slane %v1862, 4
        %v1865 = vshll.u32 %v1519, 16
        %v1867 = vrot.slane %v1865, 5
        %v1868 = vor.u32 %v1864, %v1867
        %v1869 = vrot.slane %v1868, 4
        %v1871 = vshll.u32 %v1520, 16
        %v1873 = vrot.slane %v1871, 5
        %v1874 = vsel %vm241, %v1869, %v1873
        %v1875 = vshrl.u32 %v1520, 16
        %v1877 = vrot.slane %v1875, 4
        %v1878 = vor.u32 %v1877, %v1873
        %v1879 = vrot.slane %v1878, 4
        %v1881 = vshll.u32 %v1521, 16
        %v1883 = vrot.slane %v1881, 5
        %v1884 = vsel %vm241, %v1879, %v1883
        %v1886 = vshrl.u32 %v1522, 16
        %v1888 = vrot.slane %v1886, 4
        %v1889 = vshll.u32 %v1522, 16
        %v1891 = vrot.slane %v1889, 5
        %v1892 = vor.u32 %v1888, %v1891
        %v1893 = vrot.slane %v1892, 4
        %v1895 = vshll.u32 %v1523, 16
        %v1897 = vrot.slane %v1895, 5
        %v1898 = vsel %vm241, %v1893, %v1897
        %v1899 = vshrl.u32 %v1523, 16
        %v1901 = vrot.slane %v1899, 4
        %v1902 = vor.u32 %v1901, %v1897
        %v1903 = vrot.slane %v1902, 4
        %v1905 = vshll.u32 %v1524, 16
        %v1907 = vrot.slane %v1905, 5
        %v1908 = vsel %vm241, %v1903, %v1907
        %1909 = vrot.lane.b32.xlu0 %v630, 112
        %v1910 = vpop.permute.xlu0 %1909
        %v1911 = vunpack.c.l.b16 %v1538
        %v1912 = vunpack.c.l.b16 %v1548
        %v1913 = vunpack.c.l.b16 %v1562
        %v1914 = vunpack.c.l.b16 %v1572
        %v1915 = vunpack.c.l.b16 %v1586
        %v1916 = vunpack.c.l.b16 %v1596
        %v1917 = vunpack.c.l.b16 %v1610
        %v1918 = vunpack.c.l.b16 %v1620
        %v1919 = vunpack.c.l.b16 %v1634
        %v1920 = vunpack.c.l.b16 %v1644
        %v1921 = vunpack.c.l.b16 %v1658
        %v1922 = vunpack.c.l.b16 %v1668
        %v1923 = vunpack.c.l.b16 %v1682
        %v1924 = vunpack.c.l.b16 %v1692
        %v1925 = vunpack.c.l.b16 %v1706
        %v1926 = vunpack.c.l.b16 %v1716
        %v1927 = vunpack.c.l.b16 %v1730
        %v1928 = vunpack.c.l.b16 %v1740
        %v1929 = vunpack.c.l.b16 %v1754
        %v1930 = vunpack.c.l.b16 %v1764
        %v1931 = vunpack.c.l.b16 %v1778
        %v1932 = vunpack.c.l.b16 %v1788
        %v1933 = vunpack.c.l.b16 %v1802
        %v1934 = vunpack.c.l.b16 %v1812
        %v1935 = vunpack.c.l.b16 %v1826
        %v1936 = vunpack.c.l.b16 %v1836
        %v1937 = vunpack.c.l.b16 %v1850
        %v1938 = vunpack.c.l.b16 %v1860
        %v1939 = vunpack.c.l.b16 %v1874
        %v1940 = vunpack.c.l.b16 %v1884
        %v1941 = vunpack.c.l.b16 %v1898
        %v1942 = vunpack.c.l.b16 %v1908
        %v1943 = vpack.c.b16 %v1912, %v1911
        %v1944 = vpack.c.b16 %v1914, %v1913
        %v1945 = vpack.c.b16 %v1916, %v1915
        %v1946 = vpack.c.b16 %v1918, %v1917
        %v1947 = vpack.c.b16 %v1920, %v1919
        %v1948 = vpack.c.b16 %v1922, %v1921
        %v1949 = vpack.c.b16 %v1924, %v1923
        %v1950 = vpack.c.b16 %v1926, %v1925
        %v1951 = vpack.c.b16 %v1928, %v1927
        %v1952 = vpack.c.b16 %v1930, %v1929
        %v1953 = vpack.c.b16 %v1932, %v1931
        %v1954 = vpack.c.b16 %v1934, %v1933
        %v1955 = vpack.c.b16 %v1936, %v1935
        %v1956 = vpack.c.b16 %v1938, %v1937
        %v1957 = vpack.c.b16 %v1940, %v1939
        %v1958 = vpack.c.b16 %v1942, %v1941
        %v1960 = vsel %vm681, %v1910, 0
        %v1963 = vsel %vm681, %v1943, 0
        %v1966 = vsel %vm681, %v1944, 0
        %v1969 = vsel %vm681, %v1945, 0
        %v1972 = vsel %vm681, %v1946, 0
        %v1975 = vsel %vm681, %v1947, 0
        %v1978 = vsel %vm681, %v1948, 0
        %v1981 = vsel %vm681, %v1949, 0
        %v1984 = vsel %vm681, %v1950, 0
        %v1987 = vsel %vm681, %v1951, 0
        %v1990 = vsel %vm681, %v1952, 0
        %v1993 = vsel %vm681, %v1953, 0
        %v1996 = vsel %vm681, %v1954, 0
        %v1999 = vsel %vm681, %v1955, 0
        %v2002 = vsel %vm681, %v1956, 0
        %v2005 = vsel %vm681, %v1957, 0
        %v2008 = vsel %vm681, %v1958, 0
        %2010 = vmatprep.subr.bf16.mxu0 0
        %2011 = vmatpush1.bf16.xpose.msra.mxu0 %v1984
        %2012 = vmatprep.subr.bf16.mxu0 0
        %2013 = vmatpush1.bf16.xpose.msra.mxu0 %v1981
        %2014 = vmatprep.subr.bf16.mxu0 0
        %2015 = vmatpush1.bf16.xpose.msra.mxu0 %v1978
        %2016 = vmatprep.subr.bf16.mxu0 0
        %2017 = vmatpush1.bf16.xpose.msra.mxu0 %v1975
        %2018 = vmatprep.subr.bf16.mxu0 0
        %2019 = vmatpush1.bf16.xpose.msra.mxu0 %v1972
        %2020 = vmatprep.subr.bf16.mxu0 0
        %2021 = vmatpush1.bf16.xpose.msra.mxu0 %v1969
        %2022 = vmatprep.subr.bf16.mxu0 0
        %2023 = vmatpush1.bf16.xpose.msra.mxu0 %v1966
        %2024 = vmatprep.subr.bf16.mxu0 0
        %2025 = vmatpush1.bf16.xpose.msra.mxu0 %v1963
        %2026 = vmatprep.subr.bf16.mxu0 0
        %2027 = vmatpush2.bf16.xpose.msra.mxu0 %v2008
        %2028 = vmatprep.subr.bf16.mxu0 0
        %2029 = vmatpush2.bf16.xpose.msra.mxu0 %v2005
        %2030 = vmatprep.subr.bf16.mxu0 0
        %2031 = vmatpush2.bf16.xpose.msra.mxu0 %v2002
        %2032 = vmatprep.subr.bf16.mxu0 0
        %2033 = vmatpush2.bf16.xpose.msra.mxu0 %v1999
        %2034 = vmatprep.subr.bf16.mxu0 0
        %2035 = vmatpush2.bf16.xpose.msra.mxu0 %v1996
        %2036 = vmatprep.subr.bf16.mxu0 0
        %2037 = vmatpush2.bf16.xpose.msra.mxu0 %v1993
        %2038 = vmatprep.subr.bf16.mxu0 0
        %2039 = vmatpush2.bf16.xpose.msra.mxu0 %v1990
        %2040 = vmatprep.subr.bf16.mxu0 0
        %2041 = vmatpush2.bf16.xpose.msra.mxu0 %v1987
        %2042 = vmatprep.mubr.bf16.mxu0 0
        %2043 = vmatmul.mubr.bf16.gmra.mxu0 %v1960
        %v2044 = vpop.f32.mrf.mxu0
        %v2045 = vadd.f32 0.0, %v2044
        %v2046 = vpop.f32.mrf.mxu0
        %v2047 = vadd.f32 0.0, %v2046
        %v2048 = vpop.f32.mrf.mxu0
        %v2049 = vadd.f32 0.0, %v2048
        %v2050 = vpop.f32.mrf.mxu0
        %v2051 = vadd.f32 0.0, %v2050
        %2052 = vdwg.mxu0
        %v2053 = vadd.f32 %v1473, %v2045
        %v2054 = vadd.f32 %v1474, %v2047
        %v2055 = vadd.f32 %v1475, %v2049
        %v2056 = vadd.f32 %v1476, %v2051
        %v2057 = vld [vmem:[%s1264] sm:$0xe]
        %v2058 = vld [vmem:[%s1264 + $0xc] sm:$0xe]
        %v2059 = vld [vmem:[%s1264 + $0x18] sm:$0xe]
        %v2060 = vld [vmem:[%s1264 + $0x24] sm:$0xe]
        %v2061 = vld [vmem:[%s1264 + $0x30] sm:$0xe]
        %v2062 = vld [vmem:[%s1264 + $0x3c] sm:$0xe]
        %v2063 = vld [vmem:[%s1264 + $0x48] sm:$0xe]
        %v2064 = vld [vmem:[%s1264 + $0x54] sm:$0xe]
        %v2065 = vld [vmem:[%s1264 + $0x60] sm:$0xe]
        %v2066 = vld [vmem:[%s1264 + $0x6c] sm:$0xe]
        %v2067 = vld [vmem:[%s1264 + $0x78] sm:$0xe]
        %v2068 = vld [vmem:[%s1264 + $0x84] sm:$0xe]
        %v2069 = vld [vmem:[%s1264 + $0x90] sm:$0xe]
        %v2070 = vld [vmem:[%s1264 + $0x9c] sm:$0xe]
        %v2071 = vld [vmem:[%s1264 + $0xa8] sm:$0xe]
        %v2072 = vld [vmem:[%s1264 + $0xb4] sm:$0xe]
        %v2121 = vrot.slane %v2057, 5
        %v2122 = vrot.slane %v2121, 4
        %v2123 = vrot.slane %v1478, 5
        %v2124 = vsel %vm1000, %v2122, %v2123
        %v2125 = vrot.slane %v2123, 4
        %v2126 = vrot.slane %v1479, 5
        %v2127 = vsel %vm1000, %v2125, %v2126
        %v2128 = vrot.slane %v2058, 5
        %v2129 = vrot.slane %v2128, 4
        %v2130 = vrot.slane %v1481, 5
        %v2131 = vsel %vm1000, %v2129, %v2130
        %v2132 = vrot.slane %v2130, 4
        %v2133 = vrot.slane %v1482, 5
        %v2134 = vsel %vm1000, %v2132, %v2133
        %v2135 = vrot.slane %v2059, 5
        %v2136 = vrot.slane %v2135, 4
        %v2137 = vrot.slane %v1484, 5
        %v2138 = vsel %vm1000, %v2136, %v2137
        %v2139 = vrot.slane %v2137, 4
        %v2140 = vrot.slane %v1485, 5
        %v2141 = vsel %vm1000, %v2139, %v2140
        %v2142 = vrot.slane %v2060, 5
        %v2143 = vrot.slane %v2142, 4
        %v2144 = vrot.slane %v1487, 5
        %v2145 = vsel %vm1000, %v2143, %v2144
        %v2146 = vrot.slane %v2144, 4
        %v2147 = vrot.slane %v1488, 5
        %v2148 = vsel %vm1000, %v2146, %v2147
        %v2149 = vrot.slane %v2061, 5
        %v2150 = vrot.slane %v2149, 4
        %v2151 = vrot.slane %v1490, 5
        %v2152 = vsel %vm1000, %v2150, %v2151
        %v2153 = vrot.slane %v2151, 4
        %v2154 = vrot.slane %v1491, 5
        %v2155 = vsel %vm1000, %v2153, %v2154
        %v2156 = vrot.slane %v2062, 5
        %v2157 = vrot.slane %v2156, 4
        %v2158 = vrot.slane %v1493, 5
        %v2159 = vsel %vm1000, %v2157, %v2158
        %v2160 = vrot.slane %v2158, 4
        %v2161 = vrot.slane %v1494, 5
        %v2162 = vsel %vm1000, %v2160, %v2161
        %v2163 = vrot.slane %v2063, 5
        %v2164 = vrot.slane %v2163, 4
        %v2165 = vrot.slane %v1496, 5
        %v2166 = vsel %vm1000, %v2164, %v2165
        %v2167 = vrot.slane %v2165, 4
        %v2168 = vrot.slane %v1497, 5
        %v2169 = vsel %vm1000, %v2167, %v2168
        %v2170 = vrot.slane %v2064, 5
        %v2171 = vrot.slane %v2170, 4
        %v2172 = vrot.slane %v1499, 5
        %v2173 = vsel %vm1000, %v2171, %v2172
        %v2174 = vrot.slane %v2172, 4
        %v2175 = vrot.slane %v1500, 5
        %v2176 = vsel %vm1000, %v2174, %v2175
        %v2177 = vrot.slane %v2065, 5
        %v2178 = vrot.slane %v2177, 4
        %v2179 = vrot.slane %v1502, 5
        %v2180 = vsel %vm1000, %v2178, %v2179
        %v2181 = vrot.slane %v2179, 4
        %v2182 = vrot.slane %v1503, 5
        %v2183 = vsel %vm1000, %v2181, %v2182
        %v2184 = vrot.slane %v2066, 5
        %v2185 = vrot.slane %v2184, 4
        %v2186 = vrot.slane %v1505, 5
        %v2187 = vsel %vm1000, %v2185, %v2186
        %v2188 = vrot.slane %v2186, 4
        %v2189 = vrot.slane %v1506, 5
        %v2190 = vsel %vm1000, %v2188, %v2189
        %v2191 = vrot.slane %v2067, 5
        %v2192 = vrot.slane %v2191, 4
        %v2193 = vrot.slane %v1508, 5
        %v2194 = vsel %vm1000, %v2192, %v2193
        %v2195 = vrot.slane %v2193, 4
        %v2196 = vrot.slane %v1509, 5
        %v2197 = vsel %vm1000, %v2195, %v2196
        %v2198 = vrot.slane %v2068, 5
        %v2199 = vrot.slane %v2198, 4
        %v2200 = vrot.slane %v1511, 5
        %v2201 = vsel %vm1000, %v2199, %v2200
        %v2202 = vrot.slane %v2200, 4
        %v2203 = vrot.slane %v1512, 5
        %v2204 = vsel %vm1000, %v2202, %v2203
        %v2205 = vrot.slane %v2069, 5
        %v2206 = vrot.slane %v2205, 4
        %v2207 = vrot.slane %v1514, 5
        %v2208 = vsel %vm1000, %v2206, %v2207
        %v2209 = vrot.slane %v2207, 4
        %v2210 = vrot.slane %v1515, 5
        %v2211 = vsel %vm1000, %v2209, %v2210
        %v2212 = vrot.slane %v2070, 5
        %v2213 = vrot.slane %v2212, 4
        %v2214 = vrot.slane %v1517, 5
        %v2215 = vsel %vm1000, %v2213, %v2214
        %v2216 = vrot.slane %v2214, 4
        %v2217 = vrot.slane %v1518, 5
        %v2218 = vsel %vm1000, %v2216, %v2217
        %v2219 = vrot.slane %v2071, 5
        %v2220 = vrot.slane %v2219, 4
        %v2221 = vrot.slane %v1520, 5
        %v2222 = vsel %vm1000, %v2220, %v2221
        %v2223 = vrot.slane %v2221, 4
        %v2224 = vrot.slane %v1521, 5
        %v2225 = vsel %vm1000, %v2223, %v2224
        %v2226 = vrot.slane %v2072, 5
        %v2227 = vrot.slane %v2226, 4
        %v2228 = vrot.slane %v1523, 5
        %v2229 = vsel %vm1000, %v2227, %v2228
        %v2230 = vrot.slane %v2228, 4
        %v2231 = vrot.slane %v1524, 5
        %v2232 = vsel %vm1000, %v2230, %v2231
        %2233 = vrot.lane.b32.xlu0 %v630, 108
        %v2234 = vpop.permute.xlu0 %2233
        %v2235 = vunpack.c.l.b16 %v2124
        %v2236 = vunpack.c.l.b16 %v2127
        %v2237 = vunpack.c.l.b16 %v2131
        %v2238 = vunpack.c.l.b16 %v2134
        %v2239 = vunpack.c.l.b16 %v2138
        %v2240 = vunpack.c.l.b16 %v2141
        %v2241 = vunpack.c.l.b16 %v2145
        %v2242 = vunpack.c.l.b16 %v2148
        %v2243 = vunpack.c.l.b16 %v2152
        %v2244 = vunpack.c.l.b16 %v2155
        %v2245 = vunpack.c.l.b16 %v2159
        %v2246 = vunpack.c.l.b16 %v2162
        %v2247 = vunpack.c.l.b16 %v2166
        %v2248 = vunpack.c.l.b16 %v2169
        %v2249 = vunpack.c.l.b16 %v2173
        %v2250 = vunpack.c.l.b16 %v2176
        %v2251 = vunpack.c.l.b16 %v2180
        %v2252 = vunpack.c.l.b16 %v2183
        %v2253 = vunpack.c.l.b16 %v2187
        %v2254 = vunpack.c.l.b16 %v2190
        %v2255 = vunpack.c.l.b16 %v2194
        %v2256 = vunpack.c.l.b16 %v2197
        %v2257 = vunpack.c.l.b16 %v2201
        %v2258 = vunpack.c.l.b16 %v2204
        %v2259 = vunpack.c.l.b16 %v2208
        %v2260 = vunpack.c.l.b16 %v2211
        %v2261 = vunpack.c.l.b16 %v2215
        %v2262 = vunpack.c.l.b16 %v2218
        %v2263 = vunpack.c.l.b16 %v2222
        %v2264 = vunpack.c.l.b16 %v2225
        %v2265 = vunpack.c.l.b16 %v2229
        %v2266 = vunpack.c.l.b16 %v2232
        %v2267 = vpack.c.b16 %v2236, %v2235
        %v2268 = vpack.c.b16 %v2238, %v2237
        %v2269 = vpack.c.b16 %v2240, %v2239
        %v2270 = vpack.c.b16 %v2242, %v2241
        %v2271 = vpack.c.b16 %v2244, %v2243
        %v2272 = vpack.c.b16 %v2246, %v2245
        %v2273 = vpack.c.b16 %v2248, %v2247
        %v2274 = vpack.c.b16 %v2250, %v2249
        %v2275 = vpack.c.b16 %v2252, %v2251
        %v2276 = vpack.c.b16 %v2254, %v2253
        %v2277 = vpack.c.b16 %v2256, %v2255
        %v2278 = vpack.c.b16 %v2258, %v2257
        %v2279 = vpack.c.b16 %v2260, %v2259
        %v2280 = vpack.c.b16 %v2262, %v2261
        %v2281 = vpack.c.b16 %v2264, %v2263
        %v2282 = vpack.c.b16 %v2266, %v2265
        %v2284 = vsel %vm681, %v2234, 0
        %v2287 = vsel %vm681, %v2267, 0
        %v2290 = vsel %vm681, %v2268, 0
        %v2293 = vsel %vm681, %v2269, 0
        %v2296 = vsel %vm681, %v2270, 0
        %v2299 = vsel %vm681, %v2271, 0
        %v2302 = vsel %vm681, %v2272, 0
        %v2305 = vsel %vm681, %v2273, 0
        %v2308 = vsel %vm681, %v2274, 0
        %v2311 = vsel %vm681, %v2275, 0
        %v2314 = vsel %vm681, %v2276, 0
        %v2317 = vsel %vm681, %v2277, 0
        %v2320 = vsel %vm681, %v2278, 0
        %v2323 = vsel %vm681, %v2279, 0
        %v2326 = vsel %vm681, %v2280, 0
        %v2329 = vsel %vm681, %v2281, 0
        %v2332 = vsel %vm681, %v2282, 0
        %2334 = vmatprep.subr.bf16.mxu0 0
        %2335 = vmatpush1.bf16.xpose.msra.mxu0 %v2308
        %2336 = vmatprep.subr.bf16.mxu0 0
        %2337 = vmatpush1.bf16.xpose.msra.mxu0 %v2305
        %2338 = vmatprep.subr.bf16.mxu0 0
        %2339 = vmatpush1.bf16.xpose.msra.mxu0 %v2302
        %2340 = vmatprep.subr.bf16.mxu0 0
        %2341 = vmatpush1.bf16.xpose.msra.mxu0 %v2299
        %2342 = vmatprep.subr.bf16.mxu0 0
        %2343 = vmatpush1.bf16.xpose.msra.mxu0 %v2296
        %2344 = vmatprep.subr.bf16.mxu0 0
        %2345 = vmatpush1.bf16.xpose.msra.mxu0 %v2293
        %2346 = vmatprep.subr.bf16.mxu0 0
        %2347 = vmatpush1.bf16.xpose.msra.mxu0 %v2290
        %2348 = vmatprep.subr.bf16.mxu0 0
        %2349 = vmatpush1.bf16.xpose.msra.mxu0 %v2287
        %2350 = vmatprep.subr.bf16.mxu0 0
        %2351 = vmatpush2.bf16.xpose.msra.mxu0 %v2332
        %2352 = vmatprep.subr.bf16.mxu0 0
        %2353 = vmatpush2.bf16.xpose.msra.mxu0 %v2329
        %2354 = vmatprep.subr.bf16.mxu0 0
        %2355 = vmatpush2.bf16.xpose.msra.mxu0 %v2326
        %2356 = vmatprep.subr.bf16.mxu0 0
        %2357 = vmatpush2.bf16.xpose.msra.mxu0 %v2323
        %2358 = vmatprep.subr.bf16.mxu0 0
        %2359 = vmatpush2.bf16.xpose.msra.mxu0 %v2320
        %2360 = vmatprep.subr.bf16.mxu0 0
        %2361 = vmatpush2.bf16.xpose.msra.mxu0 %v2317
        %2362 = vmatprep.subr.bf16.mxu0 0
        %2363 = vmatpush2.bf16.xpose.msra.mxu0 %v2314
        %2364 = vmatprep.subr.bf16.mxu0 0
        %2365 = vmatpush2.bf16.xpose.msra.mxu0 %v2311
        %2366 = vmatprep.mubr.bf16.mxu0 0
        %2367 = vmatmul.mubr.bf16.gmra.mxu0 %v2284
        %v2368 = vpop.f32.mrf.mxu0
        %v2369 = vadd.f32 0.0, %v2368
        %v2370 = vpop.f32.mrf.mxu0
        %v2371 = vadd.f32 0.0, %v2370
        %v2372 = vpop.f32.mrf.mxu0
        %v2373 = vadd.f32 0.0, %v2372
        %v2374 = vpop.f32.mrf.mxu0
        %v2375 = vadd.f32 0.0, %v2374
        %2376 = vdwg.mxu0
        %v2377 = vadd.f32 %v2053, %v2369
        %v2378 = vadd.f32 %v2054, %v2371
        %v2379 = vadd.f32 %v2055, %v2373
        %v2380 = vadd.f32 %v2056, %v2375
        %s2381 = sadd.s32 %s185, 2
        %s2382 = smul.u32 %s2381, 3
        %s2383 = smul.addr %s2382, 4
        %s2384 = scalar_lea.vmem %s182, %s2383
        %v2385 = vld [vmem:[%s2384] sm:$0xf]
        %v2386 = vld [vmem:[%s2384 + $0x4] sm:$0xf]
        %v2387 = vld [vmem:[%s2384 + $0xc] sm:$0xf]
        %v2388 = vld [vmem:[%s2384 + $0x10] sm:$0xf]
        %v2389 = vld [vmem:[%s2384 + $0x18] sm:$0xf]
        %v2390 = vld [vmem:[%s2384 + $0x1c] sm:$0xf]
        %v2391 = vld [vmem:[%s2384 + $0x24] sm:$0xf]
        %v2392 = vld [vmem:[%s2384 + $0x28] sm:$0xf]
        %v2393 = vld [vmem:[%s2384 + $0x30] sm:$0xf]
        %v2394 = vld [vmem:[%s2384 + $0x34] sm:$0xf]
        %v2395 = vld [vmem:[%s2384 + $0x3c] sm:$0xf]
        %v2396 = vld [vmem:[%s2384 + $0x40] sm:$0xf]
        %v2397 = vld [vmem:[%s2384 + $0x48] sm:$0xf]
        %v2398 = vld [vmem:[%s2384 + $0x4c] sm:$0xf]
        %v2399 = vld [vmem:[%s2384 + $0x54] sm:$0xf]
        %v2400 = vld [vmem:[%s2384 + $0x58] sm:$0xf]
        %v2401 = vld [vmem:[%s2384 + $0x60] sm:$0xf]
        %v2402 = vld [vmem:[%s2384 + $0x64] sm:$0xf]
        %v2403 = vld [vmem:[%s2384 + $0x6c] sm:$0xf]
        %v2404 = vld [vmem:[%s2384 + $0x70] sm:$0xf]
        %v2405 = vld [vmem:[%s2384 + $0x78] sm:$0xf]
        %v2406 = vld [vmem:[%s2384 + $0x7c] sm:$0xf]
        %v2407 = vld [vmem:[%s2384 + $0x84] sm:$0xf]
        %v2408 = vld [vmem:[%s2384 + $0x88] sm:$0xf]
        %v2409 = vld [vmem:[%s2384 + $0x90] sm:$0xf]
        %v2410 = vld [vmem:[%s2384 + $0x94] sm:$0xf]
        %v2411 = vld [vmem:[%s2384 + $0x9c] sm:$0xf]
        %v2412 = vld [vmem:[%s2384 + $0xa0] sm:$0xf]
        %v2413 = vld [vmem:[%s2384 + $0xa8] sm:$0xf]
        %v2414 = vld [vmem:[%s2384 + $0xac] sm:$0xf]
        %v2415 = vld [vmem:[%s2384 + $0xb4] sm:$0xf]
        %v2416 = vld [vmem:[%s2384 + $0xb8] sm:$0xf]
        %2417 = vrot.lane.b32.xlu0 %v630, 104
        %v2418 = vpop.permute.xlu0 %2417
        %v2451 = vunpack.c.l.b16 %v2385
        %v2452 = vunpack.c.l.b16 %v2386
        %v2453 = vunpack.c.l.b16 %v2387
        %v2454 = vunpack.c.l.b16 %v2388
        %v2455 = vunpack.c.l.b16 %v2389
        %v2456 = vunpack.c.l.b16 %v2390
        %v2457 = vunpack.c.l.b16 %v2391
        %v2458 = vunpack.c.l.b16 %v2392
        %v2459 = vunpack.c.l.b16 %v2393
        %v2460 = vunpack.c.l.b16 %v2394
        %v2461 = vunpack.c.l.b16 %v2395
        %v2462 = vunpack.c.l.b16 %v2396
        %v2463 = vunpack.c.l.b16 %v2397
        %v2464 = vunpack.c.l.b16 %v2398
        %v2465 = vunpack.c.l.b16 %v2399
        %v2466 = vunpack.c.l.b16 %v2400
        %v2467 = vunpack.c.l.b16 %v2401
        %v2468 = vunpack.c.l.b16 %v2402
        %v2469 = vunpack.c.l.b16 %v2403
        %v2470 = vunpack.c.l.b16 %v2404
        %v2471 = vunpack.c.l.b16 %v2405
        %v2472 = vunpack.c.l.b16 %v2406
        %v2473 = vunpack.c.l.b16 %v2407
        %v2474 = vunpack.c.l.b16 %v2408
        %v2475 = vunpack.c.l.b16 %v2409
        %v2476 = vunpack.c.l.b16 %v2410
        %v2477 = vunpack.c.l.b16 %v2411
        %v2478 = vunpack.c.l.b16 %v2412
        %v2479 = vunpack.c.l.b16 %v2413
        %v2480 = vunpack.c.l.b16 %v2414
        %v2481 = vunpack.c.l.b16 %v2415
        %v2482 = vunpack.c.l.b16 %v2416
        %v2483 = vpack.c.b16 %v2452, %v2451
        %v2484 = vpack.c.b16 %v2454, %v2453
        %v2485 = vpack.c.b16 %v2456, %v2455
        %v2486 = vpack.c.b16 %v2458, %v2457
        %v2487 = vpack.c.b16 %v2460, %v2459
        %v2488 = vpack.c.b16 %v2462, %v2461
        %v2489 = vpack.c.b16 %v2464, %v2463
        %v2490 = vpack.c.b16 %v2466, %v2465
        %v2491 = vpack.c.b16 %v2468, %v2467
        %v2492 = vpack.c.b16 %v2470, %v2469
        %v2493 = vpack.c.b16 %v2472, %v2471
        %v2494 = vpack.c.b16 %v2474, %v2473
        %v2495 = vpack.c.b16 %v2476, %v2475
        %v2496 = vpack.c.b16 %v2478, %v2477
        %v2497 = vpack.c.b16 %v2480, %v2479
        %v2498 = vpack.c.b16 %v2482, %v2481
        %v2500 = vsel %vm681, %v2418, 0
        %v2503 = vsel %vm681, %v2483, 0
        %v2506 = vsel %vm681, %v2484, 0
        %v2509 = vsel %vm681, %v2485, 0
        %v2512 = vsel %vm681, %v2486, 0
        %v2515 = vsel %vm681, %v2487, 0
        %v2518 = vsel %vm681, %v2488, 0
        %v2521 = vsel %vm681, %v2489, 0
        %v2524 = vsel %vm681, %v2490, 0
        %v2527 = vsel %vm681, %v2491, 0
        %v2530 = vsel %vm681, %v2492, 0
        %v2533 = vsel %vm681, %v2493, 0
        %v2536 = vsel %vm681, %v2494, 0
        %v2539 = vsel %vm681, %v2495, 0
        %v2542 = vsel %vm681, %v2496, 0
        %v2545 = vsel %vm681, %v2497, 0
        %v2548 = vsel %vm681, %v2498, 0
        %2550 = vmatprep.subr.bf16.mxu0 0
        %2551 = vmatpush1.bf16.xpose.msra.mxu0 %v2524
        %2552 = vmatprep.subr.bf16.mxu0 0
        %2553 = vmatpush1.bf16.xpose.msra.mxu0 %v2521
        %2554 = vmatprep.subr.bf16.mxu0 0
        %2555 = vmatpush1.bf16.xpose.msra.mxu0 %v2518
        %2556 = vmatprep.subr.bf16.mxu0 0
        %2557 = vmatpush1.bf16.xpose.msra.mxu0 %v2515
        %2558 = vmatprep.subr.bf16.mxu0 0
        %2559 = vmatpush1.bf16.xpose.msra.mxu0 %v2512
        %2560 = vmatprep.subr.bf16.mxu0 0
        %2561 = vmatpush1.bf16.xpose.msra.mxu0 %v2509
        %2562 = vmatprep.subr.bf16.mxu0 0
        %2563 = vmatpush1.bf16.xpose.msra.mxu0 %v2506
        %2564 = vmatprep.subr.bf16.mxu0 0
        %2565 = vmatpush1.bf16.xpose.msra.mxu0 %v2503
        %2566 = vmatprep.subr.bf16.mxu0 0
        %2567 = vmatpush2.bf16.xpose.msra.mxu0 %v2548
        %2568 = vmatprep.subr.bf16.mxu0 0
        %2569 = vmatpush2.bf16.xpose.msra.mxu0 %v2545
        %2570 = vmatprep.subr.bf16.mxu0 0
        %2571 = vmatpush2.bf16.xpose.msra.mxu0 %v2542
        %2572 = vmatprep.subr.bf16.mxu0 0
        %2573 = vmatpush2.bf16.xpose.msra.mxu0 %v2539
        %2574 = vmatprep.subr.bf16.mxu0 0
        %2575 = vmatpush2.bf16.xpose.msra.mxu0 %v2536
        %2576 = vmatprep.subr.bf16.mxu0 0
        %2577 = vmatpush2.bf16.xpose.msra.mxu0 %v2533
        %2578 = vmatprep.subr.bf16.mxu0 0
        %2579 = vmatpush2.bf16.xpose.msra.mxu0 %v2530
        %2580 = vmatprep.subr.bf16.mxu0 0
        %2581 = vmatpush2.bf16.xpose.msra.mxu0 %v2527
        %2582 = vmatprep.mubr.bf16.mxu0 0
        %2583 = vmatmul.mubr.bf16.gmra.mxu0 %v2500
        %v2584 = vpop.f32.mrf.mxu0
        %v2585 = vadd.f32 0.0, %v2584
        %v2586 = vpop.f32.mrf.mxu0
        %v2587 = vadd.f32 0.0, %v2586
        %v2588 = vpop.f32.mrf.mxu0
        %v2589 = vadd.f32 0.0, %v2588
        %v2590 = vpop.f32.mrf.mxu0
        %v2591 = vadd.f32 0.0, %v2590
        %2592 = vdwg.mxu0
        %v2593 = vadd.f32 %v2377, %v2585
        %v2594 = vadd.f32 %v2378, %v2587
        %v2595 = vadd.f32 %v2379, %v2589
        %v2596 = vadd.f32 %v2380, %v2591
        %v2597 = vld [vmem:[%s2384] sm:$0xf]
        %v2598 = vld [vmem:[%s2384 + $0x4] sm:$0xf]
        %v2599 = vld [vmem:[%s2384 + $0x8] sm:$0x1]
        %v2600 = vld [vmem:[%s2384 + $0xc] sm:$0xf]
        %v2601 = vld [vmem:[%s2384 + $0x10] sm:$0xf]
        %v2602 = vld [vmem:[%s2384 + $0x14] sm:$0x1]
        %v2603 = vld [vmem:[%s2384 + $0x18] sm:$0xf]
        %v2604 = vld [vmem:[%s2384 + $0x1c] sm:$0xf]
        %v2605 = vld [vmem:[%s2384 + $0x20] sm:$0x1]
        %v2606 = vld [vmem:[%s2384 + $0x24] sm:$0xf]
        %v2607 = vld [vmem:[%s2384 + $0x28] sm:$0xf]
        %v2608 = vld [vmem:[%s2384 + $0x2c] sm:$0x1]
        %v2609 = vld [vmem:[%s2384 + $0x30] sm:$0xf]
        %v2610 = vld [vmem:[%s2384 + $0x34] sm:$0xf]
        %v2611 = vld [vmem:[%s2384 + $0x38] sm:$0x1]
        %v2612 = vld [vmem:[%s2384 + $0x3c] sm:$0xf]
        %v2613 = vld [vmem:[%s2384 + $0x40] sm:$0xf]
        %v2614 = vld [vmem:[%s2384 + $0x44] sm:$0x1]
        %v2615 = vld [vmem:[%s2384 + $0x48] sm:$0xf]
        %v2616 = vld [vmem:[%s2384 + $0x4c] sm:$0xf]
        %v2617 = vld [vmem:[%s2384 + $0x50] sm:$0x1]
        %v2618 = vld [vmem:[%s2384 + $0x54] sm:$0xf]
        %v2619 = vld [vmem:[%s2384 + $0x58] sm:$0xf]
        %v2620 = vld [vmem:[%s2384 + $0x5c] sm:$0x1]
        %v2621 = vld [vmem:[%s2384 + $0x60] sm:$0xf]
        %v2622 = vld [vmem:[%s2384 + $0x64] sm:$0xf]
        %v2623 = vld [vmem:[%s2384 + $0x68] sm:$0x1]
        %v2624 = vld [vmem:[%s2384 + $0x6c] sm:$0xf]
        %v2625 = vld [vmem:[%s2384 + $0x70] sm:$0xf]
        %v2626 = vld [vmem:[%s2384 + $0x74] sm:$0x1]
        %v2627 = vld [vmem:[%s2384 + $0x78] sm:$0xf]
        %v2628 = vld [vmem:[%s2384 + $0x7c] sm:$0xf]
        %v2629 = vld [vmem:[%s2384 + $0x80] sm:$0x1]
        %v2630 = vld [vmem:[%s2384 + $0x84] sm:$0xf]
        %v2631 = vld [vmem:[%s2384 + $0x88] sm:$0xf]
        %v2632 = vld [vmem:[%s2384 + $0x8c] sm:$0x1]
        %v2633 = vld [vmem:[%s2384 + $0x90] sm:$0xf]
        %v2634 = vld [vmem:[%s2384 + $0x94] sm:$0xf]
        %v2635 = vld [vmem:[%s2384 + $0x98] sm:$0x1]
        %v2636 = vld [vmem:[%s2384 + $0x9c] sm:$0xf]
        %v2637 = vld [vmem:[%s2384 + $0xa0] sm:$0xf]
        %v2638 = vld [vmem:[%s2384 + $0xa4] sm:$0x1]
        %v2639 = vld [vmem:[%s2384 + $0xa8] sm:$0xf]
        %v2640 = vld [vmem:[%s2384 + $0xac] sm:$0xf]
        %v2641 = vld [vmem:[%s2384 + $0xb0] sm:$0x1]
        %v2642 = vld [vmem:[%s2384 + $0xb4] sm:$0xf]
        %v2643 = vld [vmem:[%s2384 + $0xb8] sm:$0xf]
        %v2644 = vld [vmem:[%s2384 + $0xbc] sm:$0x1]
        %v2646 = vshrl.u32 %v2597, 16
        %v2648 = vrot.slane %v2646, 4
        %v2649 = vshll.u32 %v2597, 16
        %v2651 = vrot.slane %v2649, 5
        %v2652 = vor.u32 %v2648, %v2651
        %v2653 = vrot.slane %v2652, 4
        %v2655 = vshll.u32 %v2598, 16
        %v2657 = vrot.slane %v2655, 5
        %v2658 = vsel %vm241, %v2653, %v2657
        %v2659 = vshrl.u32 %v2598, 16
        %v2661 = vrot.slane %v2659, 4
        %v2662 = vor.u32 %v2661, %v2657
        %v2663 = vrot.slane %v2662, 4
        %v2665 = vshll.u32 %v2599, 16
        %v2667 = vrot.slane %v2665, 5
        %v2668 = vsel %vm241, %v2663, %v2667
        %v2670 = vshrl.u32 %v2600, 16
        %v2672 = vrot.slane %v2670, 4
        %v2673 = vshll.u32 %v2600, 16
        %v2675 = vrot.slane %v2673, 5
        %v2676 = vor.u32 %v2672, %v2675
        %v2677 = vrot.slane %v2676, 4
        %v2679 = vshll.u32 %v2601, 16
        %v2681 = vrot.slane %v2679, 5
        %v2682 = vsel %vm241, %v2677, %v2681
        %v2683 = vshrl.u32 %v2601, 16
        %v2685 = vrot.slane %v2683, 4
        %v2686 = vor.u32 %v2685, %v2681
        %v2687 = vrot.slane %v2686, 4
        %v2689 = vshll.u32 %v2602, 16
        %v2691 = vrot.slane %v2689, 5
        %v2692 = vsel %vm241, %v2687, %v2691
        %v2694 = vshrl.u32 %v2603, 16
        %v2696 = vrot.slane %v2694, 4
        %v2697 = vshll.u32 %v2603, 16
        %v2699 = vrot.slane %v2697, 5
        %v2700 = vor.u32 %v2696, %v2699
        %v2701 = vrot.slane %v2700, 4
        %v2703 = vshll.u32 %v2604, 16
        %v2705 = vrot.slane %v2703, 5
        %v2706 = vsel %vm241, %v2701, %v2705
        %v2707 = vshrl.u32 %v2604, 16
        %v2709 = vrot.slane %v2707, 4
        %v2710 = vor.u32 %v2709, %v2705
        %v2711 = vrot.slane %v2710, 4
        %v2713 = vshll.u32 %v2605, 16
        %v2715 = vrot.slane %v2713, 5
        %v2716 = vsel %vm241, %v2711, %v2715
        %v2718 = vshrl.u32 %v2606, 16
        %v2720 = vrot.slane %v2718, 4
        %v2721 = vshll.u32 %v2606, 16
        %v2723 = vrot.slane %v2721, 5
        %v2724 = vor.u32 %v2720, %v2723
        %v2725 = vrot.slane %v2724, 4
        %v2727 = vshll.u32 %v2607, 16
        %v2729 = vrot.slane %v2727, 5
        %v2730 = vsel %vm241, %v2725, %v2729
        %v2731 = vshrl.u32 %v2607, 16
        %v2733 = vrot.slane %v2731, 4
        %v2734 = vor.u32 %v2733, %v2729
        %v2735 = vrot.slane %v2734, 4
        %v2737 = vshll.u32 %v2608, 16
        %v2739 = vrot.slane %v2737, 5
        %v2740 = vsel %vm241, %v2735, %v2739
        %v2742 = vshrl.u32 %v2609, 16
        %v2744 = vrot.slane %v2742, 4
        %v2745 = vshll.u32 %v2609, 16
        %v2747 = vrot.slane %v2745, 5
        %v2748 = vor.u32 %v2744, %v2747
        %v2749 = vrot.slane %v2748, 4
        %v2751 = vshll.u32 %v2610, 16
        %v2753 = vrot.slane %v2751, 5
        %v2754 = vsel %vm241, %v2749, %v2753
        %v2755 = vshrl.u32 %v2610, 16
        %v2757 = vrot.slane %v2755, 4
        %v2758 = vor.u32 %v2757, %v2753
        %v2759 = vrot.slane %v2758, 4
        %v2761 = vshll.u32 %v2611, 16
        %v2763 = vrot.slane %v2761, 5
        %v2764 = vsel %vm241, %v2759, %v2763
        %v2766 = vshrl.u32 %v2612, 16
        %v2768 = vrot.slane %v2766, 4
        %v2769 = vshll.u32 %v2612, 16
        %v2771 = vrot.slane %v2769, 5
        %v2772 = vor.u32 %v2768, %v2771
        %v2773 = vrot.slane %v2772, 4
        %v2775 = vshll.u32 %v2613, 16
        %v2777 = vrot.slane %v2775, 5
        %v2778 = vsel %vm241, %v2773, %v2777
        %v2779 = vshrl.u32 %v2613, 16
        %v2781 = vrot.slane %v2779, 4
        %v2782 = vor.u32 %v2781, %v2777
        %v2783 = vrot.slane %v2782, 4
        %v2785 = vshll.u32 %v2614, 16
        %v2787 = vrot.slane %v2785, 5
        %v2788 = vsel %vm241, %v2783, %v2787
        %v2790 = vshrl.u32 %v2615, 16
        %v2792 = vrot.slane %v2790, 4
        %v2793 = vshll.u32 %v2615, 16
        %v2795 = vrot.slane %v2793, 5
        %v2796 = vor.u32 %v2792, %v2795
        %v2797 = vrot.slane %v2796, 4
        %v2799 = vshll.u32 %v2616, 16
        %v2801 = vrot.slane %v2799, 5
        %v2802 = vsel %vm241, %v2797, %v2801
        %v2803 = vshrl.u32 %v2616, 16
        %v2805 = vrot.slane %v2803, 4
        %v2806 = vor.u32 %v2805, %v2801
        %v2807 = vrot.slane %v2806, 4
        %v2809 = vshll.u32 %v2617, 16
        %v2811 = vrot.slane %v2809, 5
        %v2812 = vsel %vm241, %v2807, %v2811
        %v2814 = vshrl.u32 %v2618, 16
        %v2816 = vrot.slane %v2814, 4
        %v2817 = vshll.u32 %v2618, 16
        %v2819 = vrot.slane %v2817, 5
        %v2820 = vor.u32 %v2816, %v2819
        %v2821 = vrot.slane %v2820, 4
        %v2823 = vshll.u32 %v2619, 16
        %v2825 = vrot.slane %v2823, 5
        %v2826 = vsel %vm241, %v2821, %v2825
        %v2827 = vshrl.u32 %v2619, 16
        %v2829 = vrot.slane %v2827, 4
        %v2830 = vor.u32 %v2829, %v2825
        %v2831 = vrot.slane %v2830, 4
        %v2833 = vshll.u32 %v2620, 16
        %v2835 = vrot.slane %v2833, 5
        %v2836 = vsel %vm241, %v2831, %v2835
        %v2838 = vshrl.u32 %v2621, 16
        %v2840 = vrot.slane %v2838, 4
        %v2841 = vshll.u32 %v2621, 16
        %v2843 = vrot.slane %v2841, 5
        %v2844 = vor.u32 %v2840, %v2843
        %v2845 = vrot.slane %v2844, 4
        %v2847 = vshll.u32 %v2622, 16
        %v2849 = vrot.slane %v2847, 5
        %v2850 = vsel %vm241, %v2845, %v2849
        %v2851 = vshrl.u32 %v2622, 16
        %v2853 = vrot.slane %v2851, 4
        %v2854 = vor.u32 %v2853, %v2849
        %v2855 = vrot.slane %v2854, 4
        %v2857 = vshll.u32 %v2623, 16
        %v2859 = vrot.slane %v2857, 5
        %v2860 = vsel %vm241, %v2855, %v2859
        %v2862 = vshrl.u32 %v2624, 16
        %v2864 = vrot.slane %v2862, 4
        %v2865 = vshll.u32 %v2624, 16
        %v2867 = vrot.slane %v2865, 5
        %v2868 = vor.u32 %v2864, %v2867
        %v2869 = vrot.slane %v2868, 4
        %v2871 = vshll.u32 %v2625, 16
        %v2873 = vrot.slane %v2871, 5
        %v2874 = vsel %vm241, %v2869, %v2873
        %v2875 = vshrl.u32 %v2625, 16
        %v2877 = vrot.slane %v2875, 4
        %v2878 = vor.u32 %v2877, %v2873
        %v2879 = vrot.slane %v2878, 4
        %v2881 = vshll.u32 %v2626, 16
        %v2883 = vrot.slane %v2881, 5
        %v2884 = vsel %vm241, %v2879, %v2883
        %v2886 = vshrl.u32 %v2627, 16
        %v2888 = vrot.slane %v2886, 4
        %v2889 = vshll.u32 %v2627, 16
        %v2891 = vrot.slane %v2889, 5
        %v2892 = vor.u32 %v2888, %v2891
        %v2893 = vrot.slane %v2892, 4
        %v2895 = vshll.u32 %v2628, 16
        %v2897 = vrot.slane %v2895, 5
        %v2898 = vsel %vm241, %v2893, %v2897
        %v2899 = vshrl.u32 %v2628, 16
        %v2901 = vrot.slane %v2899, 4
        %v2902 = vor.u32 %v2901, %v2897
        %v2903 = vrot.slane %v2902, 4
        %v2905 = vshll.u32 %v2629, 16
        %v2907 = vrot.slane %v2905, 5
        %v2908 = vsel %vm241, %v2903, %v2907
        %v2910 = vshrl.u32 %v2630, 16
        %v2912 = vrot.slane %v2910, 4
        %v2913 = vshll.u32 %v2630, 16
        %v2915 = vrot.slane %v2913, 5
        %v2916 = vor.u32 %v2912, %v2915
        %v2917 = vrot.slane %v2916, 4
        %v2919 = vshll.u32 %v2631, 16
        %v2921 = vrot.slane %v2919, 5
        %v2922 = vsel %vm241, %v2917, %v2921
        %v2923 = vshrl.u32 %v2631, 16
        %v2925 = vrot.slane %v2923, 4
        %v2926 = vor.u32 %v2925, %v2921
        %v2927 = vrot.slane %v2926, 4
        %v2929 = vshll.u32 %v2632, 16
        %v2931 = vrot.slane %v2929, 5
        %v2932 = vsel %vm241, %v2927, %v2931
        %v2934 = vshrl.u32 %v2633, 16
        %v2936 = vrot.slane %v2934, 4
        %v2937 = vshll.u32 %v2633, 16
        %v2939 = vrot.slane %v2937, 5
        %v2940 = vor.u32 %v2936, %v2939
        %v2941 = vrot.slane %v2940, 4
        %v2943 = vshll.u32 %v2634, 16
        %v2945 = vrot.slane %v2943, 5
        %v2946 = vsel %vm241, %v2941, %v2945
        %v2947 = vshrl.u32 %v2634, 16
        %v2949 = vrot.slane %v2947, 4
        %v2950 = vor.u32 %v2949, %v2945
        %v2951 = vrot.slane %v2950, 4
        %v2953 = vshll.u32 %v2635, 16
        %v2955 = vrot.slane %v2953, 5
        %v2956 = vsel %vm241, %v2951, %v2955
        %v2958 = vshrl.u32 %v2636, 16
        %v2960 = vrot.slane %v2958, 4
        %v2961 = vshll.u32 %v2636, 16
        %v2963 = vrot.slane %v2961, 5
        %v2964 = vor.u32 %v2960, %v2963
        %v2965 = vrot.slane %v2964, 4
        %v2967 = vshll.u32 %v2637, 16
        %v2969 = vrot.slane %v2967, 5
        %v2970 = vsel %vm241, %v2965, %v2969
        %v2971 = vshrl.u32 %v2637, 16
        %v2973 = vrot.slane %v2971, 4
        %v2974 = vor.u32 %v2973, %v2969
        %v2975 = vrot.slane %v2974, 4
        %v2977 = vshll.u32 %v2638, 16
        %v2979 = vrot.slane %v2977, 5
        %v2980 = vsel %vm241, %v2975, %v2979
        %v2982 = vshrl.u32 %v2639, 16
        %v2984 = vrot.slane %v2982, 4
        %v2985 = vshll.u32 %v2639, 16
        %v2987 = vrot.slane %v2985, 5
        %v2988 = vor.u32 %v2984, %v2987
        %v2989 = vrot.slane %v2988, 4
        %v2991 = vshll.u32 %v2640, 16
        %v2993 = vrot.slane %v2991, 5
        %v2994 = vsel %vm241, %v2989, %v2993
        %v2995 = vshrl.u32 %v2640, 16
        %v2997 = vrot.slane %v2995, 4
        %v2998 = vor.u32 %v2997, %v2993
        %v2999 = vrot.slane %v2998, 4
        %v3001 = vshll.u32 %v2641, 16
        %v3003 = vrot.slane %v3001, 5
        %v3004 = vsel %vm241, %v2999, %v3003
        %v3006 = vshrl.u32 %v2642, 16
        %v3008 = vrot.slane %v3006, 4
        %v3009 = vshll.u32 %v2642, 16
        %v3011 = vrot.slane %v3009, 5
        %v3012 = vor.u32 %v3008, %v3011
        %v3013 = vrot.slane %v3012, 4
        %v3015 = vshll.u32 %v2643, 16
        %v3017 = vrot.slane %v3015, 5
        %v3018 = vsel %vm241, %v3013, %v3017
        %v3019 = vshrl.u32 %v2643, 16
        %v3021 = vrot.slane %v3019, 4
        %v3022 = vor.u32 %v3021, %v3017
        %v3023 = vrot.slane %v3022, 4
        %v3025 = vshll.u32 %v2644, 16
        %v3027 = vrot.slane %v3025, 5
        %v3028 = vsel %vm241, %v3023, %v3027
        %3029 = vrot.lane.b32.xlu0 %v630, 100
        %v3030 = vpop.permute.xlu0 %3029
        %v3031 = vunpack.c.l.b16 %v2658
        %v3032 = vunpack.c.l.b16 %v2668
        %v3033 = vunpack.c.l.b16 %v2682
        %v3034 = vunpack.c.l.b16 %v2692
        %v3035 = vunpack.c.l.b16 %v2706
        %v3036 = vunpack.c.l.b16 %v2716
        %v3037 = vunpack.c.l.b16 %v2730
        %v3038 = vunpack.c.l.b16 %v2740
        %v3039 = vunpack.c.l.b16 %v2754
        %v3040 = vunpack.c.l.b16 %v2764
        %v3041 = vunpack.c.l.b16 %v2778
        %v3042 = vunpack.c.l.b16 %v2788
        %v3043 = vunpack.c.l.b16 %v2802
        %v3044 = vunpack.c.l.b16 %v2812
        %v3045 = vunpack.c.l.b16 %v2826
        %v3046 = vunpack.c.l.b16 %v2836
        %v3047 = vunpack.c.l.b16 %v2850
        %v3048 = vunpack.c.l.b16 %v2860
        %v3049 = vunpack.c.l.b16 %v2874
        %v3050 = vunpack.c.l.b16 %v2884
        %v3051 = vunpack.c.l.b16 %v2898
        %v3052 = vunpack.c.l.b16 %v2908
        %v3053 = vunpack.c.l.b16 %v2922
        %v3054 = vunpack.c.l.b16 %v2932
        %v3055 = vunpack.c.l.b16 %v2946
        %v3056 = vunpack.c.l.b16 %v2956
        %v3057 = vunpack.c.l.b16 %v2970
        %v3058 = vunpack.c.l.b16 %v2980
        %v3059 = vunpack.c.l.b16 %v2994
        %v3060 = vunpack.c.l.b16 %v3004
        %v3061 = vunpack.c.l.b16 %v3018
        %v3062 = vunpack.c.l.b16 %v3028
        %v3063 = vpack.c.b16 %v3032, %v3031
        %v3064 = vpack.c.b16 %v3034, %v3033
        %v3065 = vpack.c.b16 %v3036, %v3035
        %v3066 = vpack.c.b16 %v3038, %v3037
        %v3067 = vpack.c.b16 %v3040, %v3039
        %v3068 = vpack.c.b16 %v3042, %v3041
        %v3069 = vpack.c.b16 %v3044, %v3043
        %v3070 = vpack.c.b16 %v3046, %v3045
        %v3071 = vpack.c.b16 %v3048, %v3047
        %v3072 = vpack.c.b16 %v3050, %v3049
        %v3073 = vpack.c.b16 %v3052, %v3051
        %v3074 = vpack.c.b16 %v3054, %v3053
        %v3075 = vpack.c.b16 %v3056, %v3055
        %v3076 = vpack.c.b16 %v3058, %v3057
        %v3077 = vpack.c.b16 %v3060, %v3059
        %v3078 = vpack.c.b16 %v3062, %v3061
        %v3080 = vsel %vm681, %v3030, 0
        %v3083 = vsel %vm681, %v3063, 0
        %v3086 = vsel %vm681, %v3064, 0
        %v3089 = vsel %vm681, %v3065, 0
        %v3092 = vsel %vm681, %v3066, 0
        %v3095 = vsel %vm681, %v3067, 0
        %v3098 = vsel %vm681, %v3068, 0
        %v3101 = vsel %vm681, %v3069, 0
        %v3104 = vsel %vm681, %v3070, 0
        %v3107 = vsel %vm681, %v3071, 0
        %v3110 = vsel %vm681, %v3072, 0
        %v3113 = vsel %vm681, %v3073, 0
        %v3116 = vsel %vm681, %v3074, 0
        %v3119 = vsel %vm681, %v3075, 0
        %v3122 = vsel %vm681, %v3076, 0
        %v3125 = vsel %vm681, %v3077, 0
        %v3128 = vsel %vm681, %v3078, 0
        %3130 = vmatprep.subr.bf16.mxu0 0
        %3131 = vmatpush1.bf16.xpose.msra.mxu0 %v3104
        %3132 = vmatprep.subr.bf16.mxu0 0
        %3133 = vmatpush1.bf16.xpose.msra.mxu0 %v3101
        %3134 = vmatprep.subr.bf16.mxu0 0
        %3135 = vmatpush1.bf16.xpose.msra.mxu0 %v3098
        %3136 = vmatprep.subr.bf16.mxu0 0
        %3137 = vmatpush1.bf16.xpose.msra.mxu0 %v3095
        %3138 = vmatprep.subr.bf16.mxu0 0
        %3139 = vmatpush1.bf16.xpose.msra.mxu0 %v3092
        %3140 = vmatprep.subr.bf16.mxu0 0
        %3141 = vmatpush1.bf16.xpose.msra.mxu0 %v3089
        %3142 = vmatprep.subr.bf16.mxu0 0
        %3143 = vmatpush1.bf16.xpose.msra.mxu0 %v3086
        %3144 = vmatprep.subr.bf16.mxu0 0
        %3145 = vmatpush1.bf16.xpose.msra.mxu0 %v3083
        %3146 = vmatprep.subr.bf16.mxu0 0
        %3147 = vmatpush2.bf16.xpose.msra.mxu0 %v3128
        %3148 = vmatprep.subr.bf16.mxu0 0
        %3149 = vmatpush2.bf16.xpose.msra.mxu0 %v3125
        %3150 = vmatprep.subr.bf16.mxu0 0
        %3151 = vmatpush2.bf16.xpose.msra.mxu0 %v3122
        %3152 = vmatprep.subr.bf16.mxu0 0
        %3153 = vmatpush2.bf16.xpose.msra.mxu0 %v3119
        %3154 = vmatprep.subr.bf16.mxu0 0
        %3155 = vmatpush2.bf16.xpose.msra.mxu0 %v3116
        %3156 = vmatprep.subr.bf16.mxu0 0
        %3157 = vmatpush2.bf16.xpose.msra.mxu0 %v3113
        %3158 = vmatprep.subr.bf16.mxu0 0
        %3159 = vmatpush2.bf16.xpose.msra.mxu0 %v3110
        %3160 = vmatprep.subr.bf16.mxu0 0
        %3161 = vmatpush2.bf16.xpose.msra.mxu0 %v3107
        %3162 = vmatprep.mubr.bf16.mxu0 0
        %3163 = vmatmul.mubr.bf16.gmra.mxu0 %v3080
        %v3164 = vpop.f32.mrf.mxu0
        %v3165 = vadd.f32 0.0, %v3164
        %v3166 = vpop.f32.mrf.mxu0
        %v3167 = vadd.f32 0.0, %v3166
        %v3168 = vpop.f32.mrf.mxu0
        %v3169 = vadd.f32 0.0, %v3168
        %v3170 = vpop.f32.mrf.mxu0
        %v3171 = vadd.f32 0.0, %v3170
        %3172 = vdwg.mxu0
        %v3173 = vadd.f32 %v2593, %v3165
        %v3174 = vadd.f32 %v2594, %v3167
        %v3175 = vadd.f32 %v2595, %v3169
        %v3176 = vadd.f32 %v2596, %v3171
        %v3177 = vld [vmem:[%s2384] sm:$0xe]
        %v3178 = vld [vmem:[%s2384 + $0xc] sm:$0xe]
        %v3179 = vld [vmem:[%s2384 + $0x18] sm:$0xe]
        %v3180 = vld [vmem:[%s2384 + $0x24] sm:$0xe]
        %v3181 = vld [vmem:[%s2384 + $0x30] sm:$0xe]
        %v3182 = vld [vmem:[%s2384 + $0x3c] sm:$0xe]
        %v3183 = vld [vmem:[%s2384 + $0x48] sm:$0xe]
        %v3184 = vld [vmem:[%s2384 + $0x54] sm:$0xe]
        %v3185 = vld [vmem:[%s2384 + $0x60] sm:$0xe]
        %v3186 = vld [vmem:[%s2384 + $0x6c] sm:$0xe]
        %v3187 = vld [vmem:[%s2384 + $0x78] sm:$0xe]
        %v3188 = vld [vmem:[%s2384 + $0x84] sm:$0xe]
        %v3189 = vld [vmem:[%s2384 + $0x90] sm:$0xe]
        %v3190 = vld [vmem:[%s2384 + $0x9c] sm:$0xe]
        %v3191 = vld [vmem:[%s2384 + $0xa8] sm:$0xe]
        %v3192 = vld [vmem:[%s2384 + $0xb4] sm:$0xe]
        %v3241 = vrot.slane %v3177, 5
        %v3242 = vrot.slane %v3241, 4
        %v3243 = vrot.slane %v2598, 5
        %v3244 = vsel %vm1000, %v3242, %v3243
        %v3245 = vrot.slane %v3243, 4
        %v3246 = vrot.slane %v2599, 5
        %v3247 = vsel %vm1000, %v3245, %v3246
        %v3248 = vrot.slane %v3178, 5
        %v3249 = vrot.slane %v3248, 4
        %v3250 = vrot.slane %v2601, 5
        %v3251 = vsel %vm1000, %v3249, %v3250
        %v3252 = vrot.slane %v3250, 4
        %v3253 = vrot.slane %v2602, 5
        %v3254 = vsel %vm1000, %v3252, %v3253
        %v3255 = vrot.slane %v3179, 5
        %v3256 = vrot.slane %v3255, 4
        %v3257 = vrot.slane %v2604, 5
        %v3258 = vsel %vm1000, %v3256, %v3257
        %v3259 = vrot.slane %v3257, 4
        %v3260 = vrot.slane %v2605, 5
        %v3261 = vsel %vm1000, %v3259, %v3260
        %v3262 = vrot.slane %v3180, 5
        %v3263 = vrot.slane %v3262, 4
        %v3264 = vrot.slane %v2607, 5
        %v3265 = vsel %vm1000, %v3263, %v3264
        %v3266 = vrot.slane %v3264, 4
        %v3267 = vrot.slane %v2608, 5
        %v3268 = vsel %vm1000, %v3266, %v3267
        %v3269 = vrot.slane %v3181, 5
        %v3270 = vrot.slane %v3269, 4
        %v3271 = vrot.slane %v2610, 5
        %v3272 = vsel %vm1000, %v3270, %v3271
        %v3273 = vrot.slane %v3271, 4
        %v3274 = vrot.slane %v2611, 5
        %v3275 = vsel %vm1000, %v3273, %v3274
        %v3276 = vrot.slane %v3182, 5
        %v3277 = vrot.slane %v3276, 4
        %v3278 = vrot.slane %v2613, 5
        %v3279 = vsel %vm1000, %v3277, %v3278
        %v3280 = vrot.slane %v3278, 4
        %v3281 = vrot.slane %v2614, 5
        %v3282 = vsel %vm1000, %v3280, %v3281
        %v3283 = vrot.slane %v3183, 5
        %v3284 = vrot.slane %v3283, 4
        %v3285 = vrot.slane %v2616, 5
        %v3286 = vsel %vm1000, %v3284, %v3285
        %v3287 = vrot.slane %v3285, 4
        %v3288 = vrot.slane %v2617, 5
        %v3289 = vsel %vm1000, %v3287, %v3288
        %v3290 = vrot.slane %v3184, 5
        %v3291 = vrot.slane %v3290, 4
        %v3292 = vrot.slane %v2619, 5
        %v3293 = vsel %vm1000, %v3291, %v3292
        %v3294 = vrot.slane %v3292, 4
        %v3295 = vrot.slane %v2620, 5
        %v3296 = vsel %vm1000, %v3294, %v3295
        %v3297 = vrot.slane %v3185, 5
        %v3298 = vrot.slane %v3297, 4
        %v3299 = vrot.slane %v2622, 5
        %v3300 = vsel %vm1000, %v3298, %v3299
        %v3301 = vrot.slane %v3299, 4
        %v3302 = vrot.slane %v2623, 5
        %v3303 = vsel %vm1000, %v3301, %v3302
        %v3304 = vrot.slane %v3186, 5
        %v3305 = vrot.slane %v3304, 4
        %v3306 = vrot.slane %v2625, 5
        %v3307 = vsel %vm1000, %v3305, %v3306
        %v3308 = vrot.slane %v3306, 4
        %v3309 = vrot.slane %v2626, 5
        %v3310 = vsel %vm1000, %v3308, %v3309
        %v3311 = vrot.slane %v3187, 5
        %v3312 = vrot.slane %v3311, 4
        %v3313 = vrot.slane %v2628, 5
        %v3314 = vsel %vm1000, %v3312, %v3313
        %v3315 = vrot.slane %v3313, 4
        %v3316 = vrot.slane %v2629, 5
        %v3317 = vsel %vm1000, %v3315, %v3316
        %v3318 = vrot.slane %v3188, 5
        %v3319 = vrot.slane %v3318, 4
        %v3320 = vrot.slane %v2631, 5
        %v3321 = vsel %vm1000, %v3319, %v3320
        %v3322 = vrot.slane %v3320, 4
        %v3323 = vrot.slane %v2632, 5
        %v3324 = vsel %vm1000, %v3322, %v3323
        %v3325 = vrot.slane %v3189, 5
        %v3326 = vrot.slane %v3325, 4
        %v3327 = vrot.slane %v2634, 5
        %v3328 = vsel %vm1000, %v3326, %v3327
        %v3329 = vrot.slane %v3327, 4
        %v3330 = vrot.slane %v2635, 5
        %v3331 = vsel %vm1000, %v3329, %v3330
        %v3332 = vrot.slane %v3190, 5
        %v3333 = vrot.slane %v3332, 4
        %v3334 = vrot.slane %v2637, 5
        %v3335 = vsel %vm1000, %v3333, %v3334
        %v3336 = vrot.slane %v3334, 4
        %v3337 = vrot.slane %v2638, 5
        %v3338 = vsel %vm1000, %v3336, %v3337
        %v3339 = vrot.slane %v3191, 5
        %v3340 = vrot.slane %v3339, 4
        %v3341 = vrot.slane %v2640, 5
        %v3342 = vsel %vm1000, %v3340, %v3341
        %v3343 = vrot.slane %v3341, 4
        %v3344 = vrot.slane %v2641, 5
        %v3345 = vsel %vm1000, %v3343, %v3344
        %v3346 = vrot.slane %v3192, 5
        %v3347 = vrot.slane %v3346, 4
        %v3348 = vrot.slane %v2643, 5
        %v3349 = vsel %vm1000, %v3347, %v3348
        %v3350 = vrot.slane %v3348, 4
        %v3351 = vrot.slane %v2644, 5
        %v3352 = vsel %vm1000, %v3350, %v3351
        %3353 = vrot.lane.b32.xlu0 %v630, 96
        %v3354 = vpop.permute.xlu0 %3353
        %v3355 = vunpack.c.l.b16 %v3244
        %v3356 = vunpack.c.l.b16 %v3247
        %v3357 = vunpack.c.l.b16 %v3251
        %v3358 = vunpack.c.l.b16 %v3254
        %v3359 = vunpack.c.l.b16 %v3258
        %v3360 = vunpack.c.l.b16 %v3261
        %v3361 = vunpack.c.l.b16 %v3265
        %v3362 = vunpack.c.l.b16 %v3268
        %v3363 = vunpack.c.l.b16 %v3272
        %v3364 = vunpack.c.l.b16 %v3275
        %v3365 = vunpack.c.l.b16 %v3279
        %v3366 = vunpack.c.l.b16 %v3282
        %v3367 = vunpack.c.l.b16 %v3286
        %v3368 = vunpack.c.l.b16 %v3289
        %v3369 = vunpack.c.l.b16 %v3293
        %v3370 = vunpack.c.l.b16 %v3296
        %v3371 = vunpack.c.l.b16 %v3300
        %v3372 = vunpack.c.l.b16 %v3303
        %v3373 = vunpack.c.l.b16 %v3307
        %v3374 = vunpack.c.l.b16 %v3310
        %v3375 = vunpack.c.l.b16 %v3314
        %v3376 = vunpack.c.l.b16 %v3317
        %v3377 = vunpack.c.l.b16 %v3321
        %v3378 = vunpack.c.l.b16 %v3324
        %v3379 = vunpack.c.l.b16 %v3328
        %v3380 = vunpack.c.l.b16 %v3331
        %v3381 = vunpack.c.l.b16 %v3335
        %v3382 = vunpack.c.l.b16 %v3338
        %v3383 = vunpack.c.l.b16 %v3342
        %v3384 = vunpack.c.l.b16 %v3345
        %v3385 = vunpack.c.l.b16 %v3349
        %v3386 = vunpack.c.l.b16 %v3352
        %v3387 = vpack.c.b16 %v3356, %v3355
        %v3388 = vpack.c.b16 %v3358, %v3357
        %v3389 = vpack.c.b16 %v3360, %v3359
        %v3390 = vpack.c.b16 %v3362, %v3361
        %v3391 = vpack.c.b16 %v3364, %v3363
        %v3392 = vpack.c.b16 %v3366, %v3365
        %v3393 = vpack.c.b16 %v3368, %v3367
        %v3394 = vpack.c.b16 %v3370, %v3369
        %v3395 = vpack.c.b16 %v3372, %v3371
        %v3396 = vpack.c.b16 %v3374, %v3373
        %v3397 = vpack.c.b16 %v3376, %v3375
        %v3398 = vpack.c.b16 %v3378, %v3377
        %v3399 = vpack.c.b16 %v3380, %v3379
        %v3400 = vpack.c.b16 %v3382, %v3381
        %v3401 = vpack.c.b16 %v3384, %v3383
        %v3402 = vpack.c.b16 %v3386, %v3385
        %v3404 = vsel %vm681, %v3354, 0
        %v3407 = vsel %vm681, %v3387, 0
        %v3410 = vsel %vm681, %v3388, 0
        %v3413 = vsel %vm681, %v3389, 0
        %v3416 = vsel %vm681, %v3390, 0
        %v3419 = vsel %vm681, %v3391, 0
        %v3422 = vsel %vm681, %v3392, 0
        %v3425 = vsel %vm681, %v3393, 0
        %v3428 = vsel %vm681, %v3394, 0
        %v3431 = vsel %vm681, %v3395, 0
        %v3434 = vsel %vm681, %v3396, 0
        %v3437 = vsel %vm681, %v3397, 0
        %v3440 = vsel %vm681, %v3398, 0
        %v3443 = vsel %vm681, %v3399, 0
        %v3446 = vsel %vm681, %v3400, 0
        %v3449 = vsel %vm681, %v3401, 0
        %v3452 = vsel %vm681, %v3402, 0
        %3454 = vmatprep.subr.bf16.mxu0 0
        %3455 = vmatpush1.bf16.xpose.msra.mxu0 %v3428
        %3456 = vmatprep.subr.bf16.mxu0 0
        %3457 = vmatpush1.bf16.xpose.msra.mxu0 %v3425
        %3458 = vmatprep.subr.bf16.mxu0 0
        %3459 = vmatpush1.bf16.xpose.msra.mxu0 %v3422
        %3460 = vmatprep.subr.bf16.mxu0 0
        %3461 = vmatpush1.bf16.xpose.msra.mxu0 %v3419
        %3462 = vmatprep.subr.bf16.mxu0 0
        %3463 = vmatpush1.bf16.xpose.msra.mxu0 %v3416
        %3464 = vmatprep.subr.bf16.mxu0 0
        %3465 = vmatpush1.bf16.xpose.msra.mxu0 %v3413
        %3466 = vmatprep.subr.bf16.mxu0 0
        %3467 = vmatpush1.bf16.xpose.msra.mxu0 %v3410
        %3468 = vmatprep.subr.bf16.mxu0 0
        %3469 = vmatpush1.bf16.xpose.msra.mxu0 %v3407
        %3470 = vmatprep.subr.bf16.mxu0 0
        %3471 = vmatpush2.bf16.xpose.msra.mxu0 %v3452
        %3472 = vmatprep.subr.bf16.mxu0 0
        %3473 = vmatpush2.bf16.xpose.msra.mxu0 %v3449
        %3474 = vmatprep.subr.bf16.mxu0 0
        %3475 = vmatpush2.bf16.xpose.msra.mxu0 %v3446
        %3476 = vmatprep.subr.bf16.mxu0 0
        %3477 = vmatpush2.bf16.xpose.msra.mxu0 %v3443
        %3478 = vmatprep.subr.bf16.mxu0 0
        %3479 = vmatpush2.bf16.xpose.msra.mxu0 %v3440
        %3480 = vmatprep.subr.bf16.mxu0 0
        %3481 = vmatpush2.bf16.xpose.msra.mxu0 %v3437
        %3482 = vmatprep.subr.bf16.mxu0 0
        %3483 = vmatpush2.bf16.xpose.msra.mxu0 %v3434
        %3484 = vmatprep.subr.bf16.mxu0 0
        %3485 = vmatpush2.bf16.xpose.msra.mxu0 %v3431
        %3486 = vmatprep.mubr.bf16.mxu0 0
        %3487 = vmatmul.mubr.bf16.gmra.mxu0 %v3404
        %v3488 = vpop.f32.mrf.mxu0
        %v3489 = vadd.f32 0.0, %v3488
        %v3490 = vpop.f32.mrf.mxu0
        %v3491 = vadd.f32 0.0, %v3490
        %v3492 = vpop.f32.mrf.mxu0
        %v3493 = vadd.f32 0.0, %v3492
        %v3494 = vpop.f32.mrf.mxu0
        %v3495 = vadd.f32 0.0, %v3494
        %3496 = vdwg.mxu0
        %v3497 = vadd.f32 %v3173, %v3489
        %v3498 = vadd.f32 %v3174, %v3491
        %v3499 = vadd.f32 %v3175, %v3493
        %v3500 = vadd.f32 %v3176, %v3495
        %v3501 = vld [vmem:[%s2] sm:$0xff]
        %v3502 = vld [vmem:[%s2 + $0x8] sm:$0xff]
        %3504 = vset.pattern.permute.xlu0 0
        %3505 = vperm.xlu0 %3504, %v3501
        %v3506 = vpop.permute.xlu0 %3505
        %3509 = vset.pattern.permute.xlu0 0
        %3510 = vperm.xlu0 %3509, %v3502
        %v3511 = vpop.permute.xlu0 %3510
        %v3513 = vadd.f32 %v3497, %v3506
        %v3514 = vadd.f32 %v3498, %v3506
        %v3515 = vadd.f32 %v3499, %v3511
        %v3516 = vadd.f32 %v3500, %v3511
        %v3517 = vpack.c.bf16 %v3515, %v3513
        %v3518 = vpack.c.bf16 %v3516, %v3514
        %v3521 = vunpack.c.l.b16 %v3517
        %v3522 = vunpack.c.l.b16 %v3518
        %v3523 = vunpack.c.h.b16 %v3517
        %v3524 = vunpack.c.h.b16 %v3518
        %v3525 = vpack.c.b16 %v3522, %v3521
        %v3526 = vpack.c.b16 %v3524, %v3523
        %3529 = vst [vmem:[%s177] sm:$0xff] %v3525
        %3530 = vst [vmem:[%s177 + $0x8] sm:$0xff] %v3526
        %s3531 = sand.u32 %s107, 1
        %s3532 = scalar_lea.sflag [#allocation3], %s3531
        %s3533 = sand.u32 %s107, 1
        %s3534 = smul.addr %s3533, 16
        %s3535 = scalar_lea.vmem [#allocation2], %s3534
        // Predicated region
        $region33: #{tpu_custom_call.1} parent=31 // pred_check
          %p3536 = pneg %p117
        $region34: #{tpu_custom_call.1} parent=31 // pred_check_branch
          %3538 = sbr.rel (%p3536) target = $region36
        $region35: #{tpu_custom_call.1} parent=31 // pred_region
          %s3539 = smul.u32 2, %s22
          %s3541 = ssub.s32 256, 256
          %3542 = vsyncadd %s3532, %s3541
          %s3543 = smul.addr %s21, 4
          %s3544 = sadd.s32 %s3539, %s3543
          %s3545 = smul.addr %s3544, 64
          %s3546 = scalar_lea.hbm %s3, %s3545
          %s3547 = sshll.u32 %s3535, 4
          %s3548 = int_to_ptr.vmem [resolvable:$true] %s3547
          %3553 = dma.vmem_to_hbm [thread:$0]  %s3548, 256, %s3546, %s3532, 128, 128, 8
        $region36: #{tpu_custom_call.1} parent=31 // pred_fallthru
          _
      $region32: #{tpu_custom_call.1} parent=5 // pred_fallthru
        _
      %p3554 = scmp.le.s32.totalorder 2, %s12
      // Predicated region
      $region37: #{tpu_custom_call.1} parent=5 // pred_check
        %p3555 = pneg %p3554
      $region38: #{tpu_custom_call.1} parent=5 // pred_check_branch
        %3557 = sbr.rel (%p3555) target = $region40
      $region39: #{tpu_custom_call.1} parent=5 // pred_region
        %s3558 = ssub.s32 %s12, 2
        // Predicated region
        $region41: #{tpu_custom_call.1} parent=39 // pred_check
          %p3559 = pneg %p123
        $region42: #{tpu_custom_call.1} parent=39 // pred_check_branch
          %3561 = sbr.rel (%p3559) target = $region44
        $region43: #{tpu_custom_call.1} parent=39 // pred_region
          %s3562 = sand.u32 %s108, 1
          %s3563 = scalar_lea.sflag [#allocation3], %s3562
          %s3564 = sand.u32 %s108, 1
          %s3565 = smul.addr %s3564, 16
          %s3566 = scalar_lea.vmem [#allocation2], %s3565
          %3567 = dma.done %s3563, 256
        $region44: #{tpu_custom_call.1} parent=39 // pred_fallthru
          _
      $region40: #{tpu_custom_call.1} parent=5 // pred_fallthru
        _
    $region6: #{tpu_custom_call.1} parent=1 // loop_footer
      %s16 = sadd.s32 1, %s12
    $region7: #{tpu_custom_call.1} parent=1 // loop_footer_branch
      %11 = sbr.rel target = $region3
    $region8: #{tpu_custom_call.1} parent=1 // loop_exit
      _
    %3568 = vsyncpa [#allocation3], 1
    %s3569 = scalar_lea.sflag [#allocation3], 1
    %3570 = vsyncpa %s3569, 1

</llo_original>
